<compile_context>
chip_gen: v6e
topology: v6e:2x2x1
jax: 0.10.0
libtpu: 0.0.40
codegen_flags: <defaults>
</compile_context>

<pallas_src>
import functools

import jax
import jax.numpy as jnp
from jax import lax
from jax.experimental import pallas as pl
from jax.experimental.pallas import tpu as pltpu


_NEG_BIG = -1e30  # finite "-inf": exp() underflows to exactly 0, never NaN


def _layer_norm(v, w, b, eps=1e-5):
    mu = jnp.mean(v, axis=-1, keepdims=True)
    var = jnp.mean((v - mu) ** 2, axis=-1, keepdims=True)
    return (v - mu) * lax.rsqrt(var + eps) * w + b


def transformer_block_kernel(n_head,
                             xq_ref, xf_ref, mask_ref, kpm_ref,
                             ln1w_ref, ln1b_ref,
                             wq_ref, bq_ref, wk_ref, bk_ref, wv_ref, bv_ref,
                             wo_ref, bo_ref,
                             ln2w_ref, ln2b_ref,
                             w1_ref, b1_ref, w2_ref, b2_ref,
                             o_ref,
                             cat_ref):
    """One grid step == (one batch element, one query tile)."""
    x_q = xq_ref[0]                      # (TQ, E) f32 : query rows / residual base
    x_f = xf_ref[0]                      # (S,  E) f32 : all rows (keys / values)
    TQ, E = x_q.shape
    Dh = E // n_head

    # ---- hoisted parameter reads (once per invocation) ----------------------
    ln1w = ln1w_ref[...]; ln1b = ln1b_ref[...]
    ln2w = ln2w_ref[...]; ln2b = ln2b_ref[...]
    bq = bq_ref[...]; bk = bk_ref[...]; bv = bv_ref[...]; bo = bo_ref[...]
    b1 = b1_ref[...]; b2 = b2_ref[...]

    # ---- attention branch ----------------------------------------------------
    qn = _layer_norm(x_q, ln1w, ln1b).astype(jnp.bfloat16)   # (TQ, E)
    xn = _layer_norm(x_f, ln1w, ln1b).astype(jnp.bfloat16)   # (S,  E)

    # full-width projections: one MXU matmul each, bf16 inputs / f32 accumulation.
    # wq / bq were pre-scaled by 1/sqrt(Dh) on the host.
    q = jnp.dot(qn, wq_ref[...], preferred_element_type=jnp.float32) + bq   # (TQ, E)
    k = jnp.dot(xn, wk_ref[...], preferred_element_type=jnp.float32) + bk   # (S,  E)
    v = jnp.dot(xn, wv_ref[...], preferred_element_type=jnp.float32) + bv   # (S,  E)

    # additive bias computed once: attn-mask tile + per-batch key-padding row
    bias = mask_ref[...] + kpm_ref[0]                                       # (TQ, S)

    # per-head scores / softmax / PV; each head's output lands at its static
    # lane offset in cat_ref so the out-projection below is a single matmul.
    for h in range(n_head):
        sl = slice(h * Dh, (h + 1) * Dh)
        qh = q[:, sl].astype(jnp.bfloat16)                   # (TQ, Dh)
        kh = k[:, sl].astype(jnp.bfloat16)                   # (S,  Dh)
        vh = v[:, sl].astype(jnp.bfloat16)                   # (S,  Dh)
        s = lax.dot_general(qh, kh, (((1,), (1,)), ((), ())),   # q @ k^T, no .T
                            preferred_element_type=jnp.float32) + bias
        m = jnp.max(s, axis=-1, keepdims=True)
        e = jnp.exp(s - m)
        l = jnp.sum(e, axis=-1, keepdims=True)
        p = (e * pl.reciprocal(l, approx=True)).astype(jnp.bfloat16)
        cat_ref[:, sl] = jnp.dot(p, vh, preferred_element_type=jnp.float32)

    # single full-width out-projection
    attn = jnp.dot(cat_ref[...].astype(jnp.bfloat16), wo_ref[...],
                   preferred_element_type=jnp.float32) + bo
    y = x_q + attn                                            # first residual

    # ---- MLP branch ----------------------------------------------------------
    yn = _layer_norm(y, ln2w, ln2b).astype(jnp.bfloat16)
    h1 = jnp.dot(yn, w1_ref[...], preferred_element_type=jnp.float32) + b1
    h1 = jnp.maximum(h1, 0.0).astype(jnp.bfloat16)            # ReLU
    mlp = jnp.dot(h1, w2_ref[...], preferred_element_type=jnp.float32) + b2

    o_ref[0] = y + mlp                                        # second residual


_PARAM_ORDER = ('ln1_w', 'ln1_b',
                'wq', 'bq', 'wk', 'bk', 'wv', 'bv', 'wo', 'bo',
                'ln2_w', 'ln2_b',
                'w1', 'b1', 'w2', 'b2')
_BF16_WEIGHTS = ('wq', 'wk', 'wv', 'wo', 'w1', 'w2')


def _choose_q_tile(S):
    for t in (256, 128, 64, 32, 16, 8):
        if S % t == 0:
            return t
    return S


def transformer_block(x, attn_mask, key_padding_mask, params, n_head):
    """x: (B, S, E) f32; attn_mask: (S, S) additive float mask (0 / -inf);
    key_padding_mask: (B, S) bool, True == padded key (ignored)."""
    B, S, E = x.shape
    assert E % n_head == 0
    Dh = E // n_head
    x = x.astype(jnp.float32)

    # additive masks, clamped to a large finite negative value
    attn_mask = jnp.maximum(attn_mask.astype(jnp.float32), _NEG_BIG)
    kpm_add = jnp.where(key_padding_mask, _NEG_BIG, 0.0).astype(jnp.float32)
    kpm_add = kpm_add.reshape(B, 1, S)

    # host-side weight prep: fold 1/sqrt(Dh) into Wq/bq; ship matmul weights as
    # bf16 (halves DMA bytes / VMEM); biases + LN params stay f32.
    scale = 1.0 / (Dh ** 0.5)
    p = dict(params)
    p['wq'] = p['wq'] * scale
    p['bq'] = p['bq'] * scale
    prepped = []
    for name in _PARAM_ORDER:
        w = p[name].astype(jnp.float32)
        if name in _BF16_WEIGHTS:
            w = w.astype(jnp.bfloat16)
        prepped.append(w)

    TQ = _choose_q_tile(S)
    NQ = S // TQ

    def const_spec(shape):
        return pl.BlockSpec(shape, lambda b, qt, _n=len(shape): (0,) * _n)

    in_specs = ([pl.BlockSpec((1, TQ, E), lambda b, qt: (b, qt, 0)),   # x: query tile
                 pl.BlockSpec((1, S, E), lambda b, qt: (b, 0, 0)),     # x: full rows (K/V)
                 pl.BlockSpec((TQ, S), lambda b, qt: (qt, 0)),         # attn-mask tile
                 pl.BlockSpec((1, 1, S), lambda b, qt: (b, 0, 0))]     # key-padding row
                + [const_spec(w.shape) for w in prepped])

    kernel = functools.partial(transformer_block_kernel, n_head)
    return pl.pallas_call(
        kernel,
        out_shape=jax.ShapeDtypeStruct((B, S, E), jnp.float32),
        grid=(B, NQ),
        in_specs=in_specs,
        out_specs=pl.BlockSpec((1, TQ, E), lambda b, qt: (b, qt, 0)),
        scratch_shapes=[pltpu.VMEM((TQ, E), jnp.float32)],      # head-concat buffer
        compiler_params=pltpu.CompilerParams(
            dimension_semantics=("parallel", "parallel"),
            vmem_limit_bytes=48 * 1024 * 1024),                 # fits v7x's 64 MiB VMEM
    )(x, x, attn_mask, kpm_add, *prepped)


def reference(x, attn_mask, kpm_bool, p, n_head):
    """Pure-JAX reference mirroring nn.LayerNorm / nn.MultiheadAttention / MLP."""
    B, S, E = x.shape
    Dh = E // n_head

    def ln(v, w, b):
        mu = v.mean(-1, keepdims=True)
        var = ((v - mu) ** 2).mean(-1, keepdims=True)
        return (v - mu) / jnp.sqrt(var + 1e-5) * w + b

    kpm_add = jnp.where(kpm_bool, -jnp.inf, 0.0)[:, None, None, :]
    xn = ln(x, p['ln1_w'][0], p['ln1_b'][0])
    q = xn @ p['wq'] + p['bq'][0]
    k = xn @ p['wk'] + p['bk'][0]
    v = xn @ p['wv'] + p['bv'][0]
    qh = q.reshape(B, S, n_head, Dh)
    kh = k.reshape(B, S, n_head, Dh)
    vh = v.reshape(B, S, n_head, Dh)
    scores = jnp.einsum('bqhd,bkhd->bhqk', qh, kh) / jnp.sqrt(Dh)
    scores = scores + attn_mask[None, None] + kpm_add
    probs = jax.nn.softmax(scores, axis=-1)
    ao = jnp.einsum('bhqk,bkhd->bqhd', probs, vh).reshape(B, S, E)
    ao = ao @ p['wo'] + p['bo'][0]
    y = x + ao
    yn = ln(y, p['ln2_w'][0], p['ln2_b'][0])
    h1 = jax.nn.relu(yn @ p['w1'] + p['b1'][0])
    return y + h1 @ p['w2'] + p['b2'][0]


if __name__ == "__main__":
    B, S, E, H = 2, 8, 32, 4   # batch, seq, n_embd, n_head

    ks = jax.random.split(jax.random.PRNGKey(0), 13)

    def w(k, shape, scale=0.05):
        return jax.random.normal(k, shape, jnp.float32) * scale

    # deterministic synthetic parameters (shapes from the PyTorch module;
    # all Linear weights stored pre-transposed to (in, out))
    params = {
        'ln1_w': jnp.ones((1, E), jnp.float32),
        'ln1_b': jnp.zeros((1, E), jnp.float32),
        'wq': w(ks[0], (E, E)), 'bq': w(ks[1], (1, E)),
        'wk': w(ks[2], (E, E)), 'bk': w(ks[3], (1, E)),
        'wv': w(ks[4], (E, E)), 'bv': w(ks[5], (1, E)),
        'wo': w(ks[6], (E, E)), 'bo': w(ks[7], (1, E)),
        'ln2_w': jnp.ones((1, E), jnp.float32),
        'ln2_b': jnp.zeros((1, E), jnp.float32),
        'w1': w(ks[8], (E, 4 * E)), 'b1': w(ks[9], (1, 4 * E)),
        'w2': w(ks[10], (4 * E, E)), 'b2': w(ks[11], (1, E)),
    }

    x = jax.random.normal(ks[12], (B, S, E), jnp.float32)

    # causal additive float attention mask (0 / -inf), shape (S, S)
    causal = jnp.tril(jnp.ones((S, S), jnp.bool_))
    attn_mask = jnp.where(causal, 0.0, -jnp.inf).astype(jnp.float32)

    # boolean key padding mask: last 2 keys of batch 1 are padding
    key_padding_mask = jnp.zeros((B, S), jnp.bool_).at[1, S - 2:].set(True)

    out = transformer_block(x, attn_mask, key_padding_mask, params, H)
    out = jax.block_until_ready(out)

    ref = reference(x, attn_mask, key_padding_mask, params, H)
    assert out.shape == (B, S, E)
    assert not bool(jnp.any(jnp.isnan(out)))
    assert jnp.allclose(out, ref, atol=2e-2, rtol=2e-2), \
        f"max abs err {float(jnp.max(jnp.abs(out - ref)))}"

    print("KERNEL_OK")
</pallas_src>

<mosaic_0001>
module attributes {stable_mosaic.version = 11 : i64} {
  func.func @transformer_block_kernel(%arg0: i32, %arg1: i32, %arg2: memref<1x8x32xf32, #tpu.memory_space<vmem>>, %arg3: memref<1x8x32xf32, #tpu.memory_space<vmem>>, %arg4: memref<8x8xf32, #tpu.memory_space<vmem>>, %arg5: memref<1x1x8xf32, #tpu.memory_space<vmem>>, %arg6: memref<1x32xf32, #tpu.memory_space<vmem>>, %arg7: memref<1x32xf32, #tpu.memory_space<vmem>>, %arg8: memref<32x32xbf16, #tpu.memory_space<vmem>>, %arg9: memref<1x32xf32, #tpu.memory_space<vmem>>, %arg10: memref<32x32xbf16, #tpu.memory_space<vmem>>, %arg11: memref<1x32xf32, #tpu.memory_space<vmem>>, %arg12: memref<32x32xbf16, #tpu.memory_space<vmem>>, %arg13: memref<1x32xf32, #tpu.memory_space<vmem>>, %arg14: memref<32x32xbf16, #tpu.memory_space<vmem>>, %arg15: memref<1x32xf32, #tpu.memory_space<vmem>>, %arg16: memref<1x32xf32, #tpu.memory_space<vmem>>, %arg17: memref<1x32xf32, #tpu.memory_space<vmem>>, %arg18: memref<32x128xbf16, #tpu.memory_space<vmem>>, %arg19: memref<1x128xf32, #tpu.memory_space<vmem>>, %arg20: memref<128x32xbf16, #tpu.memory_space<vmem>>, %arg21: memref<1x32xf32, #tpu.memory_space<vmem>>, %arg22: memref<1x8x32xf32, #tpu.memory_space<vmem>>, %arg23: memref<8x32xf32, #tpu.memory_space<vmem>>) attributes {dimension_semantics = [#tpu.dimension_semantics<parallel>, #tpu.dimension_semantics<parallel>], iteration_bounds = array<i64: 2, 1>, scalar_prefetch = 0 : i64, scratch_operands = 1 : i64, tpu.core_type = #tpu.core_type<tc>, window_params = [{transform_indices = @transform_0, window_bounds = array<i64: 1, 8, 32>}, {transform_indices = @transform_1, window_bounds = array<i64: 1, 8, 32>}, {transform_indices = @transform_2, window_bounds = array<i64: 8, 8>}, {transform_indices = @transform_3, window_bounds = array<i64: 1, 1, 8>}, {pipeline_mode = #tpu.pipeline_mode<synchronous>, transform_indices = @transform_4, window_bounds = array<i64: 1, 32>}, {pipeline_mode = #tpu.pipeline_mode<synchronous>, transform_indices = @transform_5, window_bounds = array<i64: 1, 32>}, {pipeline_mode = #tpu.pipeline_mode<synchronous>, transform_indices = @transform_6, window_bounds = array<i64: 32, 32>}, {pipeline_mode = #tpu.pipeline_mode<synchronous>, transform_indices = @transform_7, window_bounds = array<i64: 1, 32>}, {pipeline_mode = #tpu.pipeline_mode<synchronous>, transform_indices = @transform_8, window_bounds = array<i64: 32, 32>}, {pipeline_mode = #tpu.pipeline_mode<synchronous>, transform_indices = @transform_9, window_bounds = array<i64: 1, 32>}, {pipeline_mode = #tpu.pipeline_mode<synchronous>, transform_indices = @transform_10, window_bounds = array<i64: 32, 32>}, {pipeline_mode = #tpu.pipeline_mode<synchronous>, transform_indices = @transform_11, window_bounds = array<i64: 1, 32>}, {pipeline_mode = #tpu.pipeline_mode<synchronous>, transform_indices = @transform_12, window_bounds = array<i64: 32, 32>}, {pipeline_mode = #tpu.pipeline_mode<synchronous>, transform_indices = @transform_13, window_bounds = array<i64: 1, 32>}, {pipeline_mode = #tpu.pipeline_mode<synchronous>, transform_indices = @transform_14, window_bounds = array<i64: 1, 32>}, {pipeline_mode = #tpu.pipeline_mode<synchronous>, transform_indices = @transform_15, window_bounds = array<i64: 1, 32>}, {pipeline_mode = #tpu.pipeline_mode<synchronous>, transform_indices = @transform_16, window_bounds = array<i64: 32, 128>}, {pipeline_mode = #tpu.pipeline_mode<synchronous>, transform_indices = @transform_17, window_bounds = array<i64: 1, 128>}, {pipeline_mode = #tpu.pipeline_mode<synchronous>, transform_indices = @transform_18, window_bounds = array<i64: 128, 32>}, {pipeline_mode = #tpu.pipeline_mode<synchronous>, transform_indices = @transform_19, window_bounds = array<i64: 1, 32>}, {transform_indices = @transform_20, window_bounds = array<i64: 1, 8, 32>}]} {
    %c0 = arith.constant 0 : index
    %c0_0 = arith.constant 0 : index
    %c0_1 = arith.constant 0 : index
    %0 = vector.load %arg2[%c0, %c0_0, %c0_1] : memref<1x8x32xf32, #tpu.memory_space<vmem>>, vector<1x8x32xf32>
    %1 = vector.shape_cast %0 : vector<1x8x32xf32> to vector<8x32xf32>
    %c0_2 = arith.constant 0 : index
    %c0_3 = arith.constant 0 : index
    %c0_4 = arith.constant 0 : index
    %2 = vector.load %arg3[%c0_2, %c0_3, %c0_4] : memref<1x8x32xf32, #tpu.memory_space<vmem>>, vector<1x8x32xf32>
    %3 = vector.shape_cast %2 : vector<1x8x32xf32> to vector<8x32xf32>
    %c0_5 = arith.constant 0 : index
    %c0_6 = arith.constant 0 : index
    %4 = vector.load %arg6[%c0_5, %c0_6] : memref<1x32xf32, #tpu.memory_space<vmem>>, vector<1x32xf32>
    %c0_7 = arith.constant 0 : index
    %c0_8 = arith.constant 0 : index
    %5 = vector.load %arg7[%c0_7, %c0_8] : memref<1x32xf32, #tpu.memory_space<vmem>>, vector<1x32xf32>
    %c0_9 = arith.constant 0 : index
    %c0_10 = arith.constant 0 : index
    %6 = vector.load %arg16[%c0_9, %c0_10] : memref<1x32xf32, #tpu.memory_space<vmem>>, vector<1x32xf32>
    %c0_11 = arith.constant 0 : index
    %c0_12 = arith.constant 0 : index
    %7 = vector.load %arg17[%c0_11, %c0_12] : memref<1x32xf32, #tpu.memory_space<vmem>>, vector<1x32xf32>
    %c0_13 = arith.constant 0 : index
    %c0_14 = arith.constant 0 : index
    %8 = vector.load %arg9[%c0_13, %c0_14] : memref<1x32xf32, #tpu.memory_space<vmem>>, vector<1x32xf32>
    %c0_15 = arith.constant 0 : index
    %c0_16 = arith.constant 0 : index
    %9 = vector.load %arg11[%c0_15, %c0_16] : memref<1x32xf32, #tpu.memory_space<vmem>>, vector<1x32xf32>
    %c0_17 = arith.constant 0 : index
    %c0_18 = arith.constant 0 : index
    %10 = vector.load %arg13[%c0_17, %c0_18] : memref<1x32xf32, #tpu.memory_space<vmem>>, vector<1x32xf32>
    %c0_19 = arith.constant 0 : index
    %c0_20 = arith.constant 0 : index
    %11 = vector.load %arg15[%c0_19, %c0_20] : memref<1x32xf32, #tpu.memory_space<vmem>>, vector<1x32xf32>
    %c0_21 = arith.constant 0 : index
    %c0_22 = arith.constant 0 : index
    %12 = vector.load %arg19[%c0_21, %c0_22] : memref<1x128xf32, #tpu.memory_space<vmem>>, vector<1x128xf32>
    %c0_23 = arith.constant 0 : index
    %c0_24 = arith.constant 0 : index
    %13 = vector.load %arg21[%c0_23, %c0_24] : memref<1x32xf32, #tpu.memory_space<vmem>>, vector<1x32xf32>
    %cst = arith.constant dense<0.000000e+00> : vector<8xf32>
    %14 = vector.multi_reduction <add>, %1, %cst [1] : vector<8x32xf32> to vector<8xf32>
    %15 = vector.shape_cast %14 : vector<8xf32> to vector<8x1xf32>
    %cst_25 = arith.constant 3.200000e+01 : f32
    %16 = vector.broadcast %cst_25 : f32 to vector<8x1xf32>
    %17 = arith.divf %15, %16 : vector<8x1xf32>
    %18 = vector.broadcast %17 : vector<8x1xf32> to vector<8x32xf32>
    %19 = arith.subf %1, %18 : vector<8x32xf32>
    %20 = arith.mulf %19, %19 : vector<8x32xf32>
    %cst_26 = arith.constant dense<0.000000e+00> : vector<8xf32>
    %21 = vector.multi_reduction <add>, %20, %cst_26 [1] : vector<8x32xf32> to vector<8xf32>
    %22 = vector.shape_cast %21 : vector<8xf32> to vector<8x1xf32>
    %cst_27 = arith.constant 3.200000e+01 : f32
    %23 = vector.broadcast %cst_27 : f32 to vector<8x1xf32>
    %24 = arith.divf %22, %23 : vector<8x1xf32>
    %25 = vector.broadcast %17 : vector<8x1xf32> to vector<8x32xf32>
    %26 = arith.subf %1, %25 : vector<8x32xf32>
    %cst_28 = arith.constant 9.99999974E-6 : f32
    %27 = vector.broadcast %cst_28 : f32 to vector<8x1xf32>
    %28 = arith.addf %24, %27 : vector<8x1xf32>
    %29 = math.rsqrt %28 : vector<8x1xf32>
    %30 = vector.broadcast %29 : vector<8x1xf32> to vector<8x32xf32>
    %31 = arith.mulf %26, %30 : vector<8x32xf32>
    %32 = vector.broadcast %4 : vector<1x32xf32> to vector<8x32xf32>
    %33 = arith.mulf %31, %32 : vector<8x32xf32>
    %34 = vector.broadcast %5 : vector<1x32xf32> to vector<8x32xf32>
    %35 = arith.addf %33, %34 : vector<8x32xf32>
    %36 = arith.truncf %35 : vector<8x32xf32> to vector<8x32xbf16>
    %cst_29 = arith.constant dense<0.000000e+00> : vector<8xf32>
    %37 = vector.multi_reduction <add>, %3, %cst_29 [1] : vector<8x32xf32> to vector<8xf32>
    %38 = vector.shape_cast %37 : vector<8xf32> to vector<8x1xf32>
    %cst_30 = arith.constant 3.200000e+01 : f32
    %39 = vector.broadcast %cst_30 : f32 to vector<8x1xf32>
    %40 = arith.divf %38, %39 : vector<8x1xf32>
    %41 = vector.broadcast %40 : vector<8x1xf32> to vector<8x32xf32>
    %42 = arith.subf %3, %41 : vector<8x32xf32>
    %43 = arith.mulf %42, %42 : vector<8x32xf32>
    %cst_31 = arith.constant dense<0.000000e+00> : vector<8xf32>
    %44 = vector.multi_reduction <add>, %43, %cst_31 [1] : vector<8x32xf32> to vector<8xf32>
    %45 = vector.shape_cast %44 : vector<8xf32> to vector<8x1xf32>
    %cst_32 = arith.constant 3.200000e+01 : f32
    %46 = vector.broadcast %cst_32 : f32 to vector<8x1xf32>
    %47 = arith.divf %45, %46 : vector<8x1xf32>
    %48 = vector.broadcast %40 : vector<8x1xf32> to vector<8x32xf32>
    %49 = arith.subf %3, %48 : vector<8x32xf32>
    %cst_33 = arith.constant 9.99999974E-6 : f32
    %50 = vector.broadcast %cst_33 : f32 to vector<8x1xf32>
    %51 = arith.addf %47, %50 : vector<8x1xf32>
    %52 = math.rsqrt %51 : vector<8x1xf32>
    %53 = vector.broadcast %52 : vector<8x1xf32> to vector<8x32xf32>
    %54 = arith.mulf %49, %53 : vector<8x32xf32>
    %55 = vector.broadcast %4 : vector<1x32xf32> to vector<8x32xf32>
    %56 = arith.mulf %54, %55 : vector<8x32xf32>
    %57 = vector.broadcast %5 : vector<1x32xf32> to vector<8x32xf32>
    %58 = arith.addf %56, %57 : vector<8x32xf32>
    %59 = arith.truncf %58 : vector<8x32xf32> to vector<8x32xbf16>
    %c0_34 = arith.constant 0 : index
    %c0_35 = arith.constant 0 : index
    %60 = vector.load %arg8[%c0_34, %c0_35] : memref<32x32xbf16, #tpu.memory_space<vmem>>, vector<32x32xbf16>
    %cst_36 = arith.constant dense<0.000000e+00> : vector<8x32xf32>
    %61 = tpu.matmul %36, %60, %cst_36 {dimension_numbers = #tpu.dot_dimension_numbers<[1], [0], [0], [1], [0, 0, 1, 1], [], []>} : vector<8x32xbf16>, vector<32x32xbf16>, vector<8x32xf32> -> vector<8x32xf32>
    %62 = vector.broadcast %8 : vector<1x32xf32> to vector<8x32xf32>
    %63 = arith.addf %61, %62 : vector<8x32xf32>
    %c0_37 = arith.constant 0 : index
    %c0_38 = arith.constant 0 : index
    %64 = vector.load %arg10[%c0_37, %c0_38] : memref<32x32xbf16, #tpu.memory_space<vmem>>, vector<32x32xbf16>
    %cst_39 = arith.constant dense<0.000000e+00> : vector<8x32xf32>
    %65 = tpu.matmul %59, %64, %cst_39 {dimension_numbers = #tpu.dot_dimension_numbers<[1], [0], [0], [1], [0, 0, 1, 1], [], []>} : vector<8x32xbf16>, vector<32x32xbf16>, vector<8x32xf32> -> vector<8x32xf32>
    %66 = vector.broadcast %9 : vector<1x32xf32> to vector<8x32xf32>
    %67 = arith.addf %65, %66 : vector<8x32xf32>
    %c0_40 = arith.constant 0 : index
    %c0_41 = arith.constant 0 : index
    %68 = vector.load %arg12[%c0_40, %c0_41] : memref<32x32xbf16, #tpu.memory_space<vmem>>, vector<32x32xbf16>
    %cst_42 = arith.constant dense<0.000000e+00> : vector<8x32xf32>
    %69 = tpu.matmul %59, %68, %cst_42 {dimension_numbers = #tpu.dot_dimension_numbers<[1], [0], [0], [1], [0, 0, 1, 1], [], []>} : vector<8x32xbf16>, vector<32x32xbf16>, vector<8x32xf32> -> vector<8x32xf32>
    %70 = vector.broadcast %10 : vector<1x32xf32> to vector<8x32xf32>
    %71 = arith.addf %69, %70 : vector<8x32xf32>
    %c0_43 = arith.constant 0 : index
    %c0_44 = arith.constant 0 : index
    %72 = vector.load %arg4[%c0_43, %c0_44] : memref<8x8xf32, #tpu.memory_space<vmem>>, vector<8x8xf32>
    %c0_45 = arith.constant 0 : index
    %c0_46 = arith.constant 0 : index
    %c0_47 = arith.constant 0 : index
    %73 = vector.load %arg5[%c0_45, %c0_46, %c0_47] : memref<1x1x8xf32, #tpu.memory_space<vmem>>, vector<1x1x8xf32>
    %74 = vector.shape_cast %73 : vector<1x1x8xf32> to vector<1x8xf32>
    %75 = vector.broadcast %74 : vector<1x8xf32> to vector<8x8xf32>
    %76 = arith.addf %72, %75 : vector<8x8xf32>
    %77 = vector.extract_strided_slice %63 {offsets = [0, 0], sizes = [8, 8], strides = [1, 1]} : vector<8x32xf32> to vector<8x8xf32>
    %78 = arith.truncf %77 : vector<8x8xf32> to vector<8x8xbf16>
    %79 = vector.extract_strided_slice %67 {offsets = [0, 0], sizes = [8, 8], strides = [1, 1]} : vector<8x32xf32> to vector<8x8xf32>
    %80 = arith.truncf %79 : vector<8x8xf32> to vector<8x8xbf16>
    %81 = vector.extract_strided_slice %71 {offsets = [0, 0], sizes = [8, 8], strides = [1, 1]} : vector<8x32xf32> to vector<8x8xf32>
    %82 = arith.truncf %81 : vector<8x8xf32> to vector<8x8xbf16>
    %cst_48 = arith.constant dense<0.000000e+00> : vector<8x8xf32>
    %83 = tpu.matmul %78, %80, %cst_48 {dimension_numbers = #tpu.dot_dimension_numbers<[1], [1], [0], [0], [0, 0, 1, 0], [], []>} : vector<8x8xbf16>, vector<8x8xbf16>, vector<8x8xf32> -> vector<8x8xf32>
    %84 = arith.addf %83, %76 : vector<8x8xf32>
    %cst_49 = arith.constant dense<0xFF800000> : vector<8xf32>
    %85 = vector.multi_reduction <maximumf>, %84, %cst_49 [1] : vector<8x8xf32> to vector<8xf32>
    %86 = vector.shape_cast %85 : vector<8xf32> to vector<8x1xf32>
    %87 = vector.broadcast %86 : vector<8x1xf32> to vector<8x8xf32>
    %88 = arith.subf %84, %87 : vector<8x8xf32>
    %89 = math.exp %88 : vector<8x8xf32>
    %cst_50 = arith.constant dense<0.000000e+00> : vector<8xf32>
    %90 = vector.multi_reduction <add>, %89, %cst_50 [1] : vector<8x8xf32> to vector<8xf32>
    %91 = vector.shape_cast %90 : vector<8xf32> to vector<8x1xf32>
    %92 = tpu.reciprocal %91 {approx = true} : vector<8x1xf32> -> vector<8x1xf32>
    %93 = vector.broadcast %92 : vector<8x1xf32> to vector<8x8xf32>
    %94 = arith.mulf %89, %93 : vector<8x8xf32>
    %95 = arith.truncf %94 : vector<8x8xf32> to vector<8x8xbf16>
    %cst_51 = arith.constant dense<0.000000e+00> : vector<8x8xf32>
    %96 = tpu.matmul %95, %82, %cst_51 {dimension_numbers = #tpu.dot_dimension_numbers<[1], [0], [0], [1], [0, 0, 1, 1], [], []>} : vector<8x8xbf16>, vector<8x8xbf16>, vector<8x8xf32> -> vector<8x8xf32>
    %c0_52 = arith.constant 0 : index
    %c0_53 = arith.constant 0 : index
    %97 = vector.load %arg23[%c0_52, %c0_53] : memref<8x32xf32, #tpu.memory_space<vmem>>, vector<8x8xf32>
    tpu.vector_store %arg23[%c0_52, %c0_53], %96 {strides = array<i32>} : memref<8x32xf32, #tpu.memory_space<vmem>>, vector<8x8xf32>,
    %98 = vector.extract_strided_slice %63 {offsets = [0, 8], sizes = [8, 8], strides = [1, 1]} : vector<8x32xf32> to vector<8x8xf32>
    %99 = arith.truncf %98 : vector<8x8xf32> to vector<8x8xbf16>
    %100 = vector.extract_strided_slice %67 {offsets = [0, 8], sizes = [8, 8], strides = [1, 1]} : vector<8x32xf32> to vector<8x8xf32>
    %101 = arith.truncf %100 : vector<8x8xf32> to vector<8x8xbf16>
    %102 = vector.extract_strided_slice %71 {offsets = [0, 8], sizes = [8, 8], strides = [1, 1]} : vector<8x32xf32> to vector<8x8xf32>
    %103 = arith.truncf %102 : vector<8x8xf32> to vector<8x8xbf16>
    %cst_54 = arith.constant dense<0.000000e+00> : vector<8x8xf32>
    %104 = tpu.matmul %99, %101, %cst_54 {dimension_numbers = #tpu.dot_dimension_numbers<[1], [1], [0], [0], [0, 0, 1, 0], [], []>} : vector<8x8xbf16>, vector<8x8xbf16>, vector<8x8xf32> -> vector<8x8xf32>
    %105 = arith.addf %104, %76 : vector<8x8xf32>
    %cst_55 = arith.constant dense<0xFF800000> : vector<8xf32>
    %106 = vector.multi_reduction <maximumf>, %105, %cst_55 [1] : vector<8x8xf32> to vector<8xf32>
    %107 = vector.shape_cast %106 : vector<8xf32> to vector<8x1xf32>
    %108 = vector.broadcast %107 : vector<8x1xf32> to vector<8x8xf32>
    %109 = arith.subf %105, %108 : vector<8x8xf32>
    %110 = math.exp %109 : vector<8x8xf32>
    %cst_56 = arith.constant dense<0.000000e+00> : vector<8xf32>
    %111 = vector.multi_reduction <add>, %110, %cst_56 [1] : vector<8x8xf32> to vector<8xf32>
    %112 = vector.shape_cast %111 : vector<8xf32> to vector<8x1xf32>
    %113 = tpu.reciprocal %112 {approx = true} : vector<8x1xf32> -> vector<8x1xf32>
    %114 = vector.broadcast %113 : vector<8x1xf32> to vector<8x8xf32>
    %115 = arith.mulf %110, %114 : vector<8x8xf32>
    %116 = arith.truncf %115 : vector<8x8xf32> to vector<8x8xbf16>
    %cst_57 = arith.constant dense<0.000000e+00> : vector<8x8xf32>
    %117 = tpu.matmul %116, %103, %cst_57 {dimension_numbers = #tpu.dot_dimension_numbers<[1], [0], [0], [1], [0, 0, 1, 1], [], []>} : vector<8x8xbf16>, vector<8x8xbf16>, vector<8x8xf32> -> vector<8x8xf32>
    %c0_58 = arith.constant 0 : index
    %c8 = arith.constant 8 : index
    %118 = vector.load %arg23[%c0_58, %c8] : memref<8x32xf32, #tpu.memory_space<vmem>>, vector<8x8xf32>
    tpu.vector_store %arg23[%c0_58, %c8], %117 {strides = array<i32>} : memref<8x32xf32, #tpu.memory_space<vmem>>, vector<8x8xf32>,
    %119 = vector.extract_strided_slice %63 {offsets = [0, 16], sizes = [8, 8], strides = [1, 1]} : vector<8x32xf32> to vector<8x8xf32>
    %120 = arith.truncf %119 : vector<8x8xf32> to vector<8x8xbf16>
    %121 = vector.extract_strided_slice %67 {offsets = [0, 16], sizes = [8, 8], strides = [1, 1]} : vector<8x32xf32> to vector<8x8xf32>
    %122 = arith.truncf %121 : vector<8x8xf32> to vector<8x8xbf16>
    %123 = vector.extract_strided_slice %71 {offsets = [0, 16], sizes = [8, 8], strides = [1, 1]} : vector<8x32xf32> to vector<8x8xf32>
    %124 = arith.truncf %123 : vector<8x8xf32> to vector<8x8xbf16>
    %cst_59 = arith.constant dense<0.000000e+00> : vector<8x8xf32>
    %125 = tpu.matmul %120, %122, %cst_59 {dimension_numbers = #tpu.dot_dimension_numbers<[1], [1], [0], [0], [0, 0, 1, 0], [], []>} : vector<8x8xbf16>, vector<8x8xbf16>, vector<8x8xf32> -> vector<8x8xf32>
    %126 = arith.addf %125, %76 : vector<8x8xf32>
    %cst_60 = arith.constant dense<0xFF800000> : vector<8xf32>
    %127 = vector.multi_reduction <maximumf>, %126, %cst_60 [1] : vector<8x8xf32> to vector<8xf32>
    %128 = vector.shape_cast %127 : vector<8xf32> to vector<8x1xf32>
    %129 = vector.broadcast %128 : vector<8x1xf32> to vector<8x8xf32>
    %130 = arith.subf %126, %129 : vector<8x8xf32>
    %131 = math.exp %130 : vector<8x8xf32>
    %cst_61 = arith.constant dense<0.000000e+00> : vector<8xf32>
    %132 = vector.multi_reduction <add>, %131, %cst_61 [1] : vector<8x8xf32> to vector<8xf32>
    %133 = vector.shape_cast %132 : vector<8xf32> to vector<8x1xf32>
    %134 = tpu.reciprocal %133 {approx = true} : vector<8x1xf32> -> vector<8x1xf32>
    %135 = vector.broadcast %134 : vector<8x1xf32> to vector<8x8xf32>
    %136 = arith.mulf %131, %135 : vector<8x8xf32>
    %137 = arith.truncf %136 : vector<8x8xf32> to vector<8x8xbf16>
    %cst_62 = arith.constant dense<0.000000e+00> : vector<8x8xf32>
    %138 = tpu.matmul %137, %124, %cst_62 {dimension_numbers = #tpu.dot_dimension_numbers<[1], [0], [0], [1], [0, 0, 1, 1], [], []>} : vector<8x8xbf16>, vector<8x8xbf16>, vector<8x8xf32> -> vector<8x8xf32>
    %c0_63 = arith.constant 0 : index
    %c16 = arith.constant 16 : index
    %139 = vector.load %arg23[%c0_63, %c16] : memref<8x32xf32, #tpu.memory_space<vmem>>, vector<8x8xf32>
    tpu.vector_store %arg23[%c0_63, %c16], %138 {strides = array<i32>} : memref<8x32xf32, #tpu.memory_space<vmem>>, vector<8x8xf32>,
    %140 = vector.extract_strided_slice %63 {offsets = [0, 24], sizes = [8, 8], strides = [1, 1]} : vector<8x32xf32> to vector<8x8xf32>
    %141 = arith.truncf %140 : vector<8x8xf32> to vector<8x8xbf16>
    %142 = vector.extract_strided_slice %67 {offsets = [0, 24], sizes = [8, 8], strides = [1, 1]} : vector<8x32xf32> to vector<8x8xf32>
    %143 = arith.truncf %142 : vector<8x8xf32> to vector<8x8xbf16>
    %144 = vector.extract_strided_slice %71 {offsets = [0, 24], sizes = [8, 8], strides = [1, 1]} : vector<8x32xf32> to vector<8x8xf32>
    %145 = arith.truncf %144 : vector<8x8xf32> to vector<8x8xbf16>
    %cst_64 = arith.constant dense<0.000000e+00> : vector<8x8xf32>
    %146 = tpu.matmul %141, %143, %cst_64 {dimension_numbers = #tpu.dot_dimension_numbers<[1], [1], [0], [0], [0, 0, 1, 0], [], []>} : vector<8x8xbf16>, vector<8x8xbf16>, vector<8x8xf32> -> vector<8x8xf32>
    %147 = arith.addf %146, %76 : vector<8x8xf32>
    %cst_65 = arith.constant dense<0xFF800000> : vector<8xf32>
    %148 = vector.multi_reduction <maximumf>, %147, %cst_65 [1] : vector<8x8xf32> to vector<8xf32>
    %149 = vector.shape_cast %148 : vector<8xf32> to vector<8x1xf32>
    %150 = vector.broadcast %149 : vector<8x1xf32> to vector<8x8xf32>
    %151 = arith.subf %147, %150 : vector<8x8xf32>
    %152 = math.exp %151 : vector<8x8xf32>
    %cst_66 = arith.constant dense<0.000000e+00> : vector<8xf32>
    %153 = vector.multi_reduction <add>, %152, %cst_66 [1] : vector<8x8xf32> to vector<8xf32>
    %154 = vector.shape_cast %153 : vector<8xf32> to vector<8x1xf32>
    %155 = tpu.reciprocal %154 {approx = true} : vector<8x1xf32> -> vector<8x1xf32>
    %156 = vector.broadcast %155 : vector<8x1xf32> to vector<8x8xf32>
    %157 = arith.mulf %152, %156 : vector<8x8xf32>
    %158 = arith.truncf %157 : vector<8x8xf32> to vector<8x8xbf16>
    %cst_67 = arith.constant dense<0.000000e+00> : vector<8x8xf32>
    %159 = tpu.matmul %158, %145, %cst_67 {dimension_numbers = #tpu.dot_dimension_numbers<[1], [0], [0], [1], [0, 0, 1, 1], [], []>} : vector<8x8xbf16>, vector<8x8xbf16>, vector<8x8xf32> -> vector<8x8xf32>
    %c0_68 = arith.constant 0 : index
    %c24 = arith.constant 24 : index
    %160 = vector.load %arg23[%c0_68, %c24] : memref<8x32xf32, #tpu.memory_space<vmem>>, vector<8x8xf32>
    tpu.vector_store %arg23[%c0_68, %c24], %159 {strides = array<i32>} : memref<8x32xf32, #tpu.memory_space<vmem>>, vector<8x8xf32>,
    %c0_69 = arith.constant 0 : index
    %c0_70 = arith.constant 0 : index
    %161 = vector.load %arg23[%c0_69, %c0_70] : memref<8x32xf32, #tpu.memory_space<vmem>>, vector<8x32xf32>
    %162 = arith.truncf %161 : vector<8x32xf32> to vector<8x32xbf16>
    %c0_71 = arith.constant 0 : index
    %c0_72 = arith.constant 0 : index
    %163 = vector.load %arg14[%c0_71, %c0_72] : memref<32x32xbf16, #tpu.memory_space<vmem>>, vector<32x32xbf16>
    %cst_73 = arith.constant dense<0.000000e+00> : vector<8x32xf32>
    %164 = tpu.matmul %162, %163, %cst_73 {dimension_numbers = #tpu.dot_dimension_numbers<[1], [0], [0], [1], [0, 0, 1, 1], [], []>} : vector<8x32xbf16>, vector<32x32xbf16>, vector<8x32xf32> -> vector<8x32xf32>
    %165 = vector.broadcast %11 : vector<1x32xf32> to vector<8x32xf32>
    %166 = arith.addf %164, %165 : vector<8x32xf32>
    %167 = arith.addf %1, %166 : vector<8x32xf32>
    %cst_74 = arith.constant dense<0.000000e+00> : vector<8xf32>
    %168 = vector.multi_reduction <add>, %167, %cst_74 [1] : vector<8x32xf32> to vector<8xf32>
    %169 = vector.shape_cast %168 : vector<8xf32> to vector<8x1xf32>
    %cst_75 = arith.constant 3.200000e+01 : f32
    %170 = vector.broadcast %cst_75 : f32 to vector<8x1xf32>
    %171 = arith.divf %169, %170 : vector<8x1xf32>
    %172 = vector.broadcast %171 : vector<8x1xf32> to vector<8x32xf32>
    %173 = arith.subf %167, %172 : vector<8x32xf32>
    %174 = arith.mulf %173, %173 : vector<8x32xf32>
    %cst_76 = arith.constant dense<0.000000e+00> : vector<8xf32>
    %175 = vector.multi_reduction <add>, %174, %cst_76 [1] : vector<8x32xf32> to vector<8xf32>
    %176 = vector.shape_cast %175 : vector<8xf32> to vector<8x1xf32>
    %cst_77 = arith.constant 3.200000e+01 : f32
    %177 = vector.broadcast %cst_77 : f32 to vector<8x1xf32>
    %178 = arith.divf %176, %177 : vector<8x1xf32>
    %179 = vector.broadcast %171 : vector<8x1xf32> to vector<8x32xf32>
    %180 = arith.subf %167, %179 : vector<8x32xf32>
    %cst_78 = arith.constant 9.99999974E-6 : f32
    %181 = vector.broadcast %cst_78 : f32 to vector<8x1xf32>
    %182 = arith.addf %178, %181 : vector<8x1xf32>
    %183 = math.rsqrt %182 : vector<8x1xf32>
    %184 = vector.broadcast %183 : vector<8x1xf32> to vector<8x32xf32>
    %185 = arith.mulf %180, %184 : vector<8x32xf32>
    %186 = vector.broadcast %6 : vector<1x32xf32> to vector<8x32xf32>
    %187 = arith.mulf %185, %186 : vector<8x32xf32>
    %188 = vector.broadcast %7 : vector<1x32xf32> to vector<8x32xf32>
    %189 = arith.addf %187, %188 : vector<8x32xf32>
    %190 = arith.truncf %189 : vector<8x32xf32> to vector<8x32xbf16>
    %c0_79 = arith.constant 0 : index
    %c0_80 = arith.constant 0 : index
    %191 = vector.load %arg18[%c0_79, %c0_80] : memref<32x128xbf16, #tpu.memory_space<vmem>>, vector<32x128xbf16>
    %cst_81 = arith.constant dense<0.000000e+00> : vector<8x128xf32>
    %192 = tpu.matmul %190, %191, %cst_81 {dimension_numbers = #tpu.dot_dimension_numbers<[1], [0], [0], [1], [0, 0, 1, 1], [], []>} : vector<8x32xbf16>, vector<32x128xbf16>, vector<8x128xf32> -> vector<8x128xf32>
    %193 = vector.broadcast %12 : vector<1x128xf32> to vector<8x128xf32>
    %194 = arith.addf %192, %193 : vector<8x128xf32>
    %cst_82 = arith.constant 0.000000e+00 : f32
    %195 = vector.broadcast %cst_82 : f32 to vector<8x128xf32>
    %196 = arith.maximumf %194, %195 : vector<8x128xf32>
    %197 = arith.truncf %196 : vector<8x128xf32> to vector<8x128xbf16>
    %c0_83 = arith.constant 0 : index
    %c0_84 = arith.constant 0 : index
    %198 = vector.load %arg20[%c0_83, %c0_84] : memref<128x32xbf16, #tpu.memory_space<vmem>>, vector<128x32xbf16>
    %cst_85 = arith.constant dense<0.000000e+00> : vector<8x32xf32>
    %199 = tpu.matmul %197, %198, %cst_85 {dimension_numbers = #tpu.dot_dimension_numbers<[1], [0], [0], [1], [0, 0, 1, 1], [], []>} : vector<8x128xbf16>, vector<128x32xbf16>, vector<8x32xf32> -> vector<8x32xf32>
    %200 = vector.broadcast %13 : vector<1x32xf32> to vector<8x32xf32>
    %201 = arith.addf %199, %200 : vector<8x32xf32>
    %202 = arith.addf %167, %201 : vector<8x32xf32>
    %c0_86 = arith.constant 0 : index
    %c0_87 = arith.constant 0 : index
    %c0_88 = arith.constant 0 : index
    %203 = vector.load %arg22[%c0_86, %c0_87, %c0_88] : memref<1x8x32xf32, #tpu.memory_space<vmem>>, vector<1x8x32xf32>
    %204 = vector.shape_cast %203 : vector<1x8x32xf32> to vector<8x32xf32>
    %205 = vector.shape_cast %202 : vector<8x32xf32> to vector<1x8x32xf32>
    tpu.vector_store %arg22[%c0_86, %c0_87, %c0_88], %205 {strides = array<i32>} : memref<1x8x32xf32, #tpu.memory_space<vmem>>, vector<1x8x32xf32>,
    return
  }
  func.func @transform_0(%arg0: i32, %arg1: i32) -> (i32, i32, i32) {
    %c0_i32 = arith.constant 0 : i32
    %c0_i32_0 = arith.constant 0 : i32
    return %arg0, %arg1, %c0_i32 : i32, i32, i32
  }
  func.func @transform_1(%arg0: i32, %arg1: i32) -> (i32, i32, i32) {
    %c0_i32 = arith.constant 0 : i32
    %c0_i32_0 = arith.constant 0 : i32
    %c0_i32_1 = arith.constant 0 : i32
    return %arg0, %c0_i32, %c0_i32_0 : i32, i32, i32
  }
  func.func @transform_2(%arg0: i32, %arg1: i32) -> (i32, i32) {
    %c0_i32 = arith.constant 0 : i32
    %c0_i32_0 = arith.constant 0 : i32
    return %arg1, %c0_i32 : i32, i32
  }
  func.func @transform_3(%arg0: i32, %arg1: i32) -> (i32, i32, i32) {
    %c0_i32 = arith.constant 0 : i32
    %c0_i32_0 = arith.constant 0 : i32
    %c0_i32_1 = arith.constant 0 : i32
    return %arg0, %c0_i32, %c0_i32_0 : i32, i32, i32
  }
  func.func @transform_4(%arg0: i32, %arg1: i32) -> (i32, i32) {
    %c0_i32 = arith.constant 0 : i32
    %c0_i32_0 = arith.constant 0 : i32
    %c0_i32_1 = arith.constant 0 : i32
    return %c0_i32, %c0_i32_0 : i32, i32
  }
  func.func @transform_5(%arg0: i32, %arg1: i32) -> (i32, i32) {
    %c0_i32 = arith.constant 0 : i32
    %c0_i32_0 = arith.constant 0 : i32
    %c0_i32_1 = arith.constant 0 : i32
    return %c0_i32, %c0_i32_0 : i32, i32
  }
  func.func @transform_6(%arg0: i32, %arg1: i32) -> (i32, i32) {
    %c0_i32 = arith.constant 0 : i32
    %c0_i32_0 = arith.constant 0 : i32
    %c0_i32_1 = arith.constant 0 : i32
    return %c0_i32, %c0_i32_0 : i32, i32
  }
  func.func @transform_7(%arg0: i32, %arg1: i32) -> (i32, i32) {
    %c0_i32 = arith.constant 0 : i32
    %c0_i32_0 = arith.constant 0 : i32
    %c0_i32_1 = arith.constant 0 : i32
    return %c0_i32, %c0_i32_0 : i32, i32
  }
  func.func @transform_8(%arg0: i32, %arg1: i32) -> (i32, i32) {
    %c0_i32 = arith.constant 0 : i32
    %c0_i32_0 = arith.constant 0 : i32
    %c0_i32_1 = arith.constant 0 : i32
    return %c0_i32, %c0_i32_0 : i32, i32
  }
  func.func @transform_9(%arg0: i32, %arg1: i32) -> (i32, i32) {
    %c0_i32 = arith.constant 0 : i32
    %c0_i32_0 = arith.constant 0 : i32
    %c0_i32_1 = arith.constant 0 : i32
    return %c0_i32, %c0_i32_0 : i32, i32
  }
  func.func @transform_10(%arg0: i32, %arg1: i32) -> (i32, i32) {
    %c0_i32 = arith.constant 0 : i32
    %c0_i32_0 = arith.constant 0 : i32
    %c0_i32_1 = arith.constant 0 : i32
    return %c0_i32, %c0_i32_0 : i32, i32
  }
  func.func @transform_11(%arg0: i32, %arg1: i32) -> (i32, i32) {
    %c0_i32 = arith.constant 0 : i32
    %c0_i32_0 = arith.constant 0 : i32
    %c0_i32_1 = arith.constant 0 : i32
    return %c0_i32, %c0_i32_0 : i32, i32
  }
  func.func @transform_12(%arg0: i32, %arg1: i32) -> (i32, i32) {
    %c0_i32 = arith.constant 0 : i32
    %c0_i32_0 = arith.constant 0 : i32
    %c0_i32_1 = arith.constant 0 : i32
    return %c0_i32, %c0_i32_0 : i32, i32
  }
  func.func @transform_13(%arg0: i32, %arg1: i32) -> (i32, i32) {
    %c0_i32 = arith.constant 0 : i32
    %c0_i32_0 = arith.constant 0 : i32
    %c0_i32_1 = arith.constant 0 : i32
    return %c0_i32, %c0_i32_0 : i32, i32
  }
  func.func @transform_14(%arg0: i32, %arg1: i32) -> (i32, i32) {
    %c0_i32 = arith.constant 0 : i32
    %c0_i32_0 = arith.constant 0 : i32
    %c0_i32_1 = arith.constant 0 : i32
    return %c0_i32, %c0_i32_0 : i32, i32
  }
  func.func @transform_15(%arg0: i32, %arg1: i32) -> (i32, i32) {
    %c0_i32 = arith.constant 0 : i32
    %c0_i32_0 = arith.constant 0 : i32
    %c0_i32_1 = arith.constant 0 : i32
    return %c0_i32, %c0_i32_0 : i32, i32
  }
  func.func @transform_16(%arg0: i32, %arg1: i32) -> (i32, i32) {
    %c0_i32 = arith.constant 0 : i32
    %c0_i32_0 = arith.constant 0 : i32
    %c0_i32_1 = arith.constant 0 : i32
    return %c0_i32, %c0_i32_0 : i32, i32
  }
  func.func @transform_17(%arg0: i32, %arg1: i32) -> (i32, i32) {
    %c0_i32 = arith.constant 0 : i32
    %c0_i32_0 = arith.constant 0 : i32
    %c0_i32_1 = arith.constant 0 : i32
    return %c0_i32, %c0_i32_0 : i32, i32
  }
  func.func @transform_18(%arg0: i32, %arg1: i32) -> (i32, i32) {
    %c0_i32 = arith.constant 0 : i32
    %c0_i32_0 = arith.constant 0 : i32
    %c0_i32_1 = arith.constant 0 : i32
    return %c0_i32, %c0_i32_0 : i32, i32
  }
  func.func @transform_19(%arg0: i32, %arg1: i32) -> (i32, i32) {
    %c0_i32 = arith.constant 0 : i32
    %c0_i32_0 = arith.constant 0 : i32
    %c0_i32_1 = arith.constant 0 : i32
    return %c0_i32, %c0_i32_0 : i32, i32
  }
  func.func @transform_20(%arg0: i32, %arg1: i32) -> (i32, i32, i32) {
    %c0_i32 = arith.constant 0 : i32
    %c0_i32_0 = arith.constant 0 : i32
    return %arg0, %arg1, %c0_i32 : i32, i32, i32
  }
}

</mosaic_0001>

<llo_original>
// kernel: tpu_custom_call.1
$region0: #{tpu_custom_call.1}
  #allocation0 [shape = 'u32[]', space=smem, size = 0x4, offset = 0x4, fixed_abs, tag = 'smem constant byte address 0x4 - core index']
  #allocation1 [shape = 'u32[144,128]{1,0:T(1,128)}', space=vmem, size = 0x12000, scoped, tag = 'internal scratch']
  #allocation2 [shape = 'f32[8,32]{1,0:T(8,128)}', space=vmem, size = 0x1000, scoped, tag = 'scratch operand']
  %s0 = inlined_call_operand.vmem [shape: f32[2,8,32], index: 0, kind: input, shape index: {}]
  %s1 = inlined_call_operand.vmem [shape: f32[2,8,32], index: 1, kind: input, shape index: {}]
  %s2 = inlined_call_operand.hbm [shape: f32[8,8], index: 2, kind: input, shape index: {}]
  %s3 = inlined_call_operand.hbm [shape: f32[2,1,8], index: 3, kind: input, shape index: {}]
  %s4 = inlined_call_operand.hbm [shape: f32[1,32], index: 4, kind: input, shape index: {}]
  %s5 = inlined_call_operand.hbm [shape: f32[1,32], index: 5, kind: input, shape index: {}]
  %s6 = inlined_call_operand.vmem [shape: bf16[32,32], index: 6, kind: input, shape index: {}]
  %s7 = inlined_call_operand.hbm [shape: f32[1,32], index: 7, kind: input, shape index: {}]
  %s8 = inlined_call_operand.vmem [shape: bf16[32,32], index: 8, kind: input, shape index: {}]
  %s9 = inlined_call_operand.hbm [shape: f32[1,32], index: 9, kind: input, shape index: {}]
  %s10 = inlined_call_operand.vmem [shape: bf16[32,32], index: 10, kind: input, shape index: {}]
  %s11 = inlined_call_operand.hbm [shape: f32[1,32], index: 11, kind: input, shape index: {}]
  %s12 = inlined_call_operand.vmem [shape: bf16[32,32], index: 12, kind: input, shape index: {}]
  %s13 = inlined_call_operand.hbm [shape: f32[1,32], index: 13, kind: input, shape index: {}]
  %s14 = inlined_call_operand.hbm [shape: f32[1,32], index: 14, kind: input, shape index: {}]
  %s15 = inlined_call_operand.hbm [shape: f32[1,32], index: 15, kind: input, shape index: {}]
  %s16 = inlined_call_operand.hbm [shape: bf16[32,128], index: 16, kind: input, shape index: {}]
  %s17 = inlined_call_operand.hbm [shape: f32[1,128], index: 17, kind: input, shape index: {}]
  %s18 = inlined_call_operand.vmem [shape: bf16[128,32], index: 18, kind: input, shape index: {}]
  %s19 = inlined_call_operand.vmem [shape: f32[1,32], index: 19, kind: input, shape index: {}]
  %s20 = inlined_call_operand.hbm [shape: f32[2,8,32], index: 20, kind: output, shape index: {}]
  %s21 = sld [smem:[#allocation0]]
  $region161: #{tpu_custom_call.1} parent=0
    _
  %s23 = ssub.s32 1, %s21
  %s24 = scalar_select 0, %s23, %s21
  $region1: #{tpu_custom_call.1} parent=0
    #allocation3 [shape = 'u8[4096]{0}', space=vmem, size = 0x1000, scoped, tag = 'input window, operand 2, single buffered']
    #allocation4 [shape = 's32[2]{0}', space=sflag, size = 0x8, scoped, tag = 'scoped memory for tpu_custom_call.1']
    #allocation5 [shape = 's32[2]{0}', space=sflag, size = 0x8, scoped, tag = 'scoped memory for tpu_custom_call.1']
    #allocation6 [shape = 'u8[1024]{0}', space=vmem, size = 0x400, scoped, tag = 'input window, operand 3']
    #allocation7 [shape = 's32[2]{0}', space=sflag, size = 0x8, scoped, tag = 'scoped memory for tpu_custom_call.1']
    #allocation8 [shape = 'u8[512]{0}', space=vmem, size = 0x400, scoped, tag = 'input window, operand 4, single buffered']
    #allocation9 [shape = 'u8[512]{0}', space=vmem, size = 0x400, scoped, tag = 'input window, operand 5, single buffered']
    #allocation10 [shape = 's32[1]{0}', space=sflag, size = 0x4, scoped, tag = 'scoped memory for tpu_custom_call.1']
    #allocation11 [shape = 'u8[512]{0}', space=vmem, size = 0x400, scoped, tag = 'input window, operand 7, single buffered']
    #allocation12 [shape = 'u8[512]{0}', space=vmem, size = 0x400, scoped, tag = 'input window, operand 9, single buffered']
    #allocation13 [shape = 's32[1]{0}', space=sflag, size = 0x4, scoped, tag = 'scoped memory for tpu_custom_call.1']
    #allocation14 [shape = 'u8[512]{0}', space=vmem, size = 0x400, scoped, tag = 'input window, operand 11, single buffered']
    #allocation15 [shape = 'u8[512]{0}', space=vmem, size = 0x400, scoped, tag = 'input window, operand 13, single buffered']
    #allocation16 [shape = 's32[1]{0}', space=sflag, size = 0x4, scoped, tag = 'scoped memory for tpu_custom_call.1']
    #allocation17 [shape = 'u8[512]{0}', space=vmem, size = 0x400, scoped, tag = 'input window, operand 14, single buffered']
    #allocation18 [shape = 'u8[512]{0}', space=vmem, size = 0x400, scoped, tag = 'input window, operand 15, single buffered']
    #allocation19 [shape = 's32[1]{0}', space=sflag, size = 0x4, scoped, tag = 'scoped memory for tpu_custom_call.1']
    #allocation20 [shape = 'u8[8192]{0}', space=vmem, size = 0x2000, scoped, tag = 'input window, operand 16, single buffered']
    #allocation21 [shape = 'u8[512]{0}', space=vmem, size = 0x400, scoped, tag = 'input window, operand 17, single buffered']
    #allocation22 [shape = 's32[1]{0}', space=sflag, size = 0x4, scoped, tag = 'scoped memory for tpu_custom_call.1']
    #allocation23 [shape = 'u8[8192]{0}', space=vmem, size = 0x2000, scoped, tag = 'output window, operand 0']
    %25 = vsyncpa [#allocation4], 0
    %26 = vsyncpa [#allocation7], 0
    %s27 = scalar_lea.sflag [#allocation7], 1
    %28 = vsyncpa %s27, 0
    %29 = vsyncpa [#allocation10], 0
    %30 = vsyncpa [#allocation13], 0
    %31 = vsyncpa [#allocation16], 0
    %32 = vsyncpa [#allocation19], 0
    %33 = vsyncpa [#allocation22], 0
    %34 = vsyncpa [#allocation5], 0
    %s35 = scalar_lea.sflag [#allocation5], 1
    %36 = vsyncpa %s35, 0
    loop: start=0, step=1, limit=4
    $region2: #{tpu_custom_call.1} parent=1 // loop_pre_header
      _
    $region3: #{tpu_custom_call.1} parent=1 // loop_header
      %s38 = sphi 0, %s42
      %p39 = scmp.ge.s32.totalorder %s38, 4
      %s45 = sphi 0, %s57
      %s46 = sphi 0, %s53
      %s47 = sphi 0, %s45
      %s48 = sphi 0, %s46
      %s49 = sphi 0, %s47
      %s50 = sphi 0, %s48
      %s62 = sphi 0, %s64
      %s65 = sphi 0, %s62
      %s66 = sphi 0, %s65
      %s82 = sphi 0, %s66
      %s88 = sphi 0, %s90
      %s91 = sphi 0, %s88
      %s92 = sphi 0, %s91
      %s108 = sphi 0, %s92
      %s114 = sphi 0, %s116
      %s117 = sphi 0, %s114
      %s118 = sphi 0, %s117
      %s134 = sphi 0, %s118
      %s140 = sphi 0, %s142
      %s143 = sphi 0, %s140
      %s144 = sphi 0, %s143
      %s160 = sphi 0, %s144
      %s164 = sphi 0, %s164
      %s166 = sphi 0, %s164
      %s167 = sphi 0, %s166
      %s181 = sphi 0, %s167
      %s185 = sphi 0, %s185
      %s187 = sphi 0, %s185
      %s188 = sphi 0, %s187
      %s202 = sphi 0, %s188
      %s206 = sphi 0, %s206
      %s208 = sphi 0, %s206
      %s209 = sphi 0, %s208
      %s223 = sphi 0, %s209
      %s227 = sphi 0, %s227
      %s229 = sphi 0, %s227
      %s230 = sphi 0, %s229
      %s244 = sphi 0, %s230
      %s248 = sphi 0, %s248
      %s250 = sphi 0, %s248
      %s251 = sphi 0, %s250
      %s265 = sphi 0, %s251
      %s269 = sphi 0, %s269
      %s271 = sphi 0, %s269
      %s272 = sphi 0, %s271
      %s286 = sphi 0, %s272
      %s290 = sphi 0, %s290
      %s292 = sphi 0, %s290
      %s293 = sphi 0, %s292
      %s307 = sphi 0, %s293
      %s311 = sphi 0, %s311
      %s313 = sphi 0, %s311
      %s314 = sphi 0, %s313
      %s328 = sphi 0, %s314
      %s332 = sphi 0, %s332
      %s334 = sphi 0, %s332
      %s335 = sphi 0, %s334
      %s349 = sphi 0, %s335
      %s353 = sphi 0, %s353
      %s355 = sphi 0, %s353
      %s356 = sphi 0, %s355
      %s370 = sphi 0, %s356
      %s374 = sphi 0, %s374
      %s376 = sphi 0, %s374
      %s377 = sphi 0, %s376
      %s391 = sphi 0, %s377
      %s395 = sphi 0, %s395
      %s397 = sphi 0, %s395
      %s398 = sphi 0, %s397
      %s412 = sphi 0, %s398
      %s416 = sphi 0, %s416
      %s418 = sphi 0, %s416
      %s419 = sphi 0, %s418
      %s433 = sphi 0, %s419
      %s437 = sphi 0, %s437
      %s439 = sphi 0, %s437
      %s440 = sphi 0, %s439
      %s454 = sphi 0, %s440
      %s458 = sphi 0, %s458
      %s460 = sphi 0, %s458
      %s461 = sphi 0, %s460
      %s475 = sphi 0, %s461
      %s479 = sphi 0, %s479
      %s481 = sphi 0, %s479
      %s482 = sphi 0, %s481
      %s496 = sphi 0, %s482
      %s504 = sphi 0, %s506
      %s507 = sphi 0, %s504
      %s508 = sphi 0, %s507
      %s524 = sphi 0, %s508
    $region4: #{tpu_custom_call.1} parent=1 // loop_header_branch
      %41 = sbr.rel (%p39) target = $region8
    $region5: #{tpu_custom_call.1} parent=1 // loop_body
      %s43 = ssub.s32 %s38, 1
      %s44 = ssub.s32 %s38, 2
      %s51 = sadd.s32 1, %s46
      %p52 = scmp.ge.s32.totalorder %s51, 1
      %s53 = scalar_select %p52, 0, %s51
      %s54 = sadd.s32 1, %s45
      %s55 = scalar_select %p52, %s54, %s45
      %p56 = scmp.ge.s32.totalorder %s55, 2
      %s57 = scalar_select %p56, 0, %s55
      %s58 = ssub.s32 %s45, %s57
      %s59 = ssub.s32 %s46, %s53
      %s60 = sor.u32 %s58, %s59
      %p61 = scmp.eq.s32.totalorder %s60, 0
      %s63 = sadd.s32 %s62, 1
      %s64 = scalar_select %p61, %s62, %s63
      %p67 = pneg %p61
      %p68 = scmp.eq.s32.totalorder %s38, 1
      %p69 = por %p67, %p68
      %p70 = scmp.ne.s32.totalorder %s62, %s65
      %p71 = scmp.eq.s32.totalorder %s38, 0
      %p72 = por %p70, %p71
      %p73 = scmp.ne.s32.totalorder %s62, %s65
      %p74 = scmp.eq.s32.totalorder %s43, 1
      %p75 = por %p73, %p74
      %p76 = scmp.ne.s32.totalorder %s65, %s66
      %p77 = scmp.eq.s32.totalorder %s43, 0
      %p78 = por %p76, %p77
      %p79 = scmp.ne.s32.totalorder %s65, %s66
      %p80 = scmp.eq.s32.totalorder %s44, 1
      %p81 = por %p79, %p80
      %p83 = scmp.ne.s32.totalorder %s66, %s82
      %p84 = scmp.eq.s32.totalorder %s44, 0
      %p85 = por %p83, %p84
      %s86 = ssub.s32 %s45, %s57
      %p87 = scmp.eq.s32.totalorder %s86, 0
      %s89 = sadd.s32 %s88, 1
      %s90 = scalar_select %p87, %s88, %s89
      %p93 = pneg %p87
      %p94 = scmp.eq.s32.totalorder %s38, 1
      %p95 = por %p93, %p94
      %p96 = scmp.ne.s32.totalorder %s88, %s91
      %p97 = scmp.eq.s32.totalorder %s38, 0
      %p98 = por %p96, %p97
      %p99 = scmp.ne.s32.totalorder %s88, %s91
      %p100 = scmp.eq.s32.totalorder %s43, 1
      %p101 = por %p99, %p100
      %p102 = scmp.ne.s32.totalorder %s91, %s92
      %p103 = scmp.eq.s32.totalorder %s43, 0
      %p104 = por %p102, %p103
      %p105 = scmp.ne.s32.totalorder %s91, %s92
      %p106 = scmp.eq.s32.totalorder %s44, 1
      %p107 = por %p105, %p106
      %p109 = scmp.ne.s32.totalorder %s92, %s108
      %p110 = scmp.eq.s32.totalorder %s44, 0
      %p111 = por %p109, %p110
      %s112 = ssub.s32 %s46, %s53
      %p113 = scmp.eq.s32.totalorder %s112, 0
      %s115 = sadd.s32 %s114, 1
      %s116 = scalar_select %p113, %s114, %s115
      %p119 = pneg %p113
      %p120 = scmp.eq.s32.totalorder %s38, 1
      %p121 = por %p119, %p120
      %p122 = scmp.ne.s32.totalorder %s114, %s117
      %p123 = scmp.eq.s32.totalorder %s38, 0
      %p124 = por %p122, %p123
      %p125 = scmp.ne.s32.totalorder %s114, %s117
      %p126 = scmp.eq.s32.totalorder %s43, 1
      %p127 = por %p125, %p126
      %p128 = scmp.ne.s32.totalorder %s117, %s118
      %p129 = scmp.eq.s32.totalorder %s43, 0
      %p130 = por %p128, %p129
      %p131 = scmp.ne.s32.totalorder %s117, %s118
      %p132 = scmp.eq.s32.totalorder %s44, 1
      %p133 = por %p131, %p132
      %p135 = scmp.ne.s32.totalorder %s118, %s134
      %p136 = scmp.eq.s32.totalorder %s44, 0
      %p137 = por %p135, %p136
      %s138 = ssub.s32 %s45, %s57
      %p139 = scmp.eq.s32.totalorder %s138, 0
      %s141 = sadd.s32 %s140, 1
      %s142 = scalar_select %p139, %s140, %s141
      %p145 = pneg %p139
      %p146 = scmp.eq.s32.totalorder %s38, 1
      %p147 = por %p145, %p146
      %p148 = scmp.ne.s32.totalorder %s140, %s143
      %p149 = scmp.eq.s32.totalorder %s38, 0
      %p150 = por %p148, %p149
      %p151 = scmp.ne.s32.totalorder %s140, %s143
      %p152 = scmp.eq.s32.totalorder %s43, 1
      %p153 = por %p151, %p152
      %p154 = scmp.ne.s32.totalorder %s143, %s144
      %p155 = scmp.eq.s32.totalorder %s43, 0
      %p156 = por %p154, %p155
      %p157 = scmp.ne.s32.totalorder %s143, %s144
      %p158 = scmp.eq.s32.totalorder %s44, 1
      %p159 = por %p157, %p158
      %p161 = scmp.ne.s32.totalorder %s144, %s160
      %p162 = scmp.eq.s32.totalorder %s44, 0
      %p163 = por %p161, %p162
      %s165 = sadd.s32 %s164, 1
      %p168 = scmp.eq.s32.totalorder %s38, 1
      %p169 = scmp.ne.s32.totalorder %s164, %s166
      %p170 = scmp.eq.s32.totalorder %s38, 0
      %p171 = por %p169, %p170
      %p172 = scmp.ne.s32.totalorder %s164, %s166
      %p173 = scmp.eq.s32.totalorder %s43, 1
      %p174 = por %p172, %p173
      %p175 = scmp.ne.s32.totalorder %s166, %s167
      %p176 = scmp.eq.s32.totalorder %s43, 0
      %p177 = por %p175, %p176
      %p178 = scmp.ne.s32.totalorder %s166, %s167
      %p179 = scmp.eq.s32.totalorder %s44, 1
      %p180 = por %p178, %p179
      %p182 = scmp.ne.s32.totalorder %s167, %s181
      %p183 = scmp.eq.s32.totalorder %s44, 0
      %p184 = por %p182, %p183
      %s186 = sadd.s32 %s185, 1
      %p189 = scmp.eq.s32.totalorder %s38, 1
      %p190 = scmp.ne.s32.totalorder %s185, %s187
      %p191 = scmp.eq.s32.totalorder %s38, 0
      %p192 = por %p190, %p191
      %p193 = scmp.ne.s32.totalorder %s185, %s187
      %p194 = scmp.eq.s32.totalorder %s43, 1
      %p195 = por %p193, %p194
      %p196 = scmp.ne.s32.totalorder %s187, %s188
      %p197 = scmp.eq.s32.totalorder %s43, 0
      %p198 = por %p196, %p197
      %p199 = scmp.ne.s32.totalorder %s187, %s188
      %p200 = scmp.eq.s32.totalorder %s44, 1
      %p201 = por %p199, %p200
      %p203 = scmp.ne.s32.totalorder %s188, %s202
      %p204 = scmp.eq.s32.totalorder %s44, 0
      %p205 = por %p203, %p204
      %s207 = sadd.s32 %s206, 1
      %p210 = scmp.eq.s32.totalorder %s38, 1
      %p211 = scmp.ne.s32.totalorder %s206, %s208
      %p212 = scmp.eq.s32.totalorder %s38, 0
      %p213 = por %p211, %p212
      %p214 = scmp.ne.s32.totalorder %s206, %s208
      %p215 = scmp.eq.s32.totalorder %s43, 1
      %p216 = por %p214, %p215
      %p217 = scmp.ne.s32.totalorder %s208, %s209
      %p218 = scmp.eq.s32.totalorder %s43, 0
      %p219 = por %p217, %p218
      %p220 = scmp.ne.s32.totalorder %s208, %s209
      %p221 = scmp.eq.s32.totalorder %s44, 1
      %p222 = por %p220, %p221
      %p224 = scmp.ne.s32.totalorder %s209, %s223
      %p225 = scmp.eq.s32.totalorder %s44, 0
      %p226 = por %p224, %p225
      %s228 = sadd.s32 %s227, 1
      %p231 = scmp.eq.s32.totalorder %s38, 1
      %p232 = scmp.ne.s32.totalorder %s227, %s229
      %p233 = scmp.eq.s32.totalorder %s38, 0
      %p234 = por %p232, %p233
      %p235 = scmp.ne.s32.totalorder %s227, %s229
      %p236 = scmp.eq.s32.totalorder %s43, 1
      %p237 = por %p235, %p236
      %p238 = scmp.ne.s32.totalorder %s229, %s230
      %p239 = scmp.eq.s32.totalorder %s43, 0
      %p240 = por %p238, %p239
      %p241 = scmp.ne.s32.totalorder %s229, %s230
      %p242 = scmp.eq.s32.totalorder %s44, 1
      %p243 = por %p241, %p242
      %p245 = scmp.ne.s32.totalorder %s230, %s244
      %p246 = scmp.eq.s32.totalorder %s44, 0
      %p247 = por %p245, %p246
      %s249 = sadd.s32 %s248, 1
      %p252 = scmp.eq.s32.totalorder %s38, 1
      %p253 = scmp.ne.s32.totalorder %s248, %s250
      %p254 = scmp.eq.s32.totalorder %s38, 0
      %p255 = por %p253, %p254
      %p256 = scmp.ne.s32.totalorder %s248, %s250
      %p257 = scmp.eq.s32.totalorder %s43, 1
      %p258 = por %p256, %p257
      %p259 = scmp.ne.s32.totalorder %s250, %s251
      %p260 = scmp.eq.s32.totalorder %s43, 0
      %p261 = por %p259, %p260
      %p262 = scmp.ne.s32.totalorder %s250, %s251
      %p263 = scmp.eq.s32.totalorder %s44, 1
      %p264 = por %p262, %p263
      %p266 = scmp.ne.s32.totalorder %s251, %s265
      %p267 = scmp.eq.s32.totalorder %s44, 0
      %p268 = por %p266, %p267
      %s270 = sadd.s32 %s269, 1
      %p273 = scmp.eq.s32.totalorder %s38, 1
      %p274 = scmp.ne.s32.totalorder %s269, %s271
      %p275 = scmp.eq.s32.totalorder %s38, 0
      %p276 = por %p274, %p275
      %p277 = scmp.ne.s32.totalorder %s269, %s271
      %p278 = scmp.eq.s32.totalorder %s43, 1
      %p279 = por %p277, %p278
      %p280 = scmp.ne.s32.totalorder %s271, %s272
      %p281 = scmp.eq.s32.totalorder %s43, 0
      %p282 = por %p280, %p281
      %p283 = scmp.ne.s32.totalorder %s271, %s272
      %p284 = scmp.eq.s32.totalorder %s44, 1
      %p285 = por %p283, %p284
      %p287 = scmp.ne.s32.totalorder %s272, %s286
      %p288 = scmp.eq.s32.totalorder %s44, 0
      %p289 = por %p287, %p288
      %s291 = sadd.s32 %s290, 1
      %p294 = scmp.eq.s32.totalorder %s38, 1
      %p295 = scmp.ne.s32.totalorder %s290, %s292
      %p296 = scmp.eq.s32.totalorder %s38, 0
      %p297 = por %p295, %p296
      %p298 = scmp.ne.s32.totalorder %s290, %s292
      %p299 = scmp.eq.s32.totalorder %s43, 1
      %p300 = por %p298, %p299
      %p301 = scmp.ne.s32.totalorder %s292, %s293
      %p302 = scmp.eq.s32.totalorder %s43, 0
      %p303 = por %p301, %p302
      %p304 = scmp.ne.s32.totalorder %s292, %s293
      %p305 = scmp.eq.s32.totalorder %s44, 1
      %p306 = por %p304, %p305
      %p308 = scmp.ne.s32.totalorder %s293, %s307
      %p309 = scmp.eq.s32.totalorder %s44, 0
      %p310 = por %p308, %p309
      %s312 = sadd.s32 %s311, 1
      %p315 = scmp.eq.s32.totalorder %s38, 1
      %p316 = scmp.ne.s32.totalorder %s311, %s313
      %p317 = scmp.eq.s32.totalorder %s38, 0
      %p318 = por %p316, %p317
      %p319 = scmp.ne.s32.totalorder %s311, %s313
      %p320 = scmp.eq.s32.totalorder %s43, 1
      %p321 = por %p319, %p320
      %p322 = scmp.ne.s32.totalorder %s313, %s314
      %p323 = scmp.eq.s32.totalorder %s43, 0
      %p324 = por %p322, %p323
      %p325 = scmp.ne.s32.totalorder %s313, %s314
      %p326 = scmp.eq.s32.totalorder %s44, 1
      %p327 = por %p325, %p326
      %p329 = scmp.ne.s32.totalorder %s314, %s328
      %p330 = scmp.eq.s32.totalorder %s44, 0
      %p331 = por %p329, %p330
      %s333 = sadd.s32 %s332, 1
      %p336 = scmp.eq.s32.totalorder %s38, 1
      %p337 = scmp.ne.s32.totalorder %s332, %s334
      %p338 = scmp.eq.s32.totalorder %s38, 0
      %p339 = por %p337, %p338
      %p340 = scmp.ne.s32.totalorder %s332, %s334
      %p341 = scmp.eq.s32.totalorder %s43, 1
      %p342 = por %p340, %p341
      %p343 = scmp.ne.s32.totalorder %s334, %s335
      %p344 = scmp.eq.s32.totalorder %s43, 0
      %p345 = por %p343, %p344
      %p346 = scmp.ne.s32.totalorder %s334, %s335
      %p347 = scmp.eq.s32.totalorder %s44, 1
      %p348 = por %p346, %p347
      %p350 = scmp.ne.s32.totalorder %s335, %s349
      %p351 = scmp.eq.s32.totalorder %s44, 0
      %p352 = por %p350, %p351
      %s354 = sadd.s32 %s353, 1
      %p357 = scmp.eq.s32.totalorder %s38, 1
      %p358 = scmp.ne.s32.totalorder %s353, %s355
      %p359 = scmp.eq.s32.totalorder %s38, 0
      %p360 = por %p358, %p359
      %p361 = scmp.ne.s32.totalorder %s353, %s355
      %p362 = scmp.eq.s32.totalorder %s43, 1
      %p363 = por %p361, %p362
      %p364 = scmp.ne.s32.totalorder %s355, %s356
      %p365 = scmp.eq.s32.totalorder %s43, 0
      %p366 = por %p364, %p365
      %p367 = scmp.ne.s32.totalorder %s355, %s356
      %p368 = scmp.eq.s32.totalorder %s44, 1
      %p369 = por %p367, %p368
      %p371 = scmp.ne.s32.totalorder %s356, %s370
      %p372 = scmp.eq.s32.totalorder %s44, 0
      %p373 = por %p371, %p372
      %s375 = sadd.s32 %s374, 1
      %p378 = scmp.eq.s32.totalorder %s38, 1
      %p379 = scmp.ne.s32.totalorder %s374, %s376
      %p380 = scmp.eq.s32.totalorder %s38, 0
      %p381 = por %p379, %p380
      %p382 = scmp.ne.s32.totalorder %s374, %s376
      %p383 = scmp.eq.s32.totalorder %s43, 1
      %p384 = por %p382, %p383
      %p385 = scmp.ne.s32.totalorder %s376, %s377
      %p386 = scmp.eq.s32.totalorder %s43, 0
      %p387 = por %p385, %p386
      %p388 = scmp.ne.s32.totalorder %s376, %s377
      %p389 = scmp.eq.s32.totalorder %s44, 1
      %p390 = por %p388, %p389
      %p392 = scmp.ne.s32.totalorder %s377, %s391
      %p393 = scmp.eq.s32.totalorder %s44, 0
      %p394 = por %p392, %p393
      %s396 = sadd.s32 %s395, 1
      %p399 = scmp.eq.s32.totalorder %s38, 1
      %p400 = scmp.ne.s32.totalorder %s395, %s397
      %p401 = scmp.eq.s32.totalorder %s38, 0
      %p402 = por %p400, %p401
      %p403 = scmp.ne.s32.totalorder %s395, %s397
      %p404 = scmp.eq.s32.totalorder %s43, 1
      %p405 = por %p403, %p404
      %p406 = scmp.ne.s32.totalorder %s397, %s398
      %p407 = scmp.eq.s32.totalorder %s43, 0
      %p408 = por %p406, %p407
      %p409 = scmp.ne.s32.totalorder %s397, %s398
      %p410 = scmp.eq.s32.totalorder %s44, 1
      %p411 = por %p409, %p410
      %p413 = scmp.ne.s32.totalorder %s398, %s412
      %p414 = scmp.eq.s32.totalorder %s44, 0
      %p415 = por %p413, %p414
      %s417 = sadd.s32 %s416, 1
      %p420 = scmp.eq.s32.totalorder %s38, 1
      %p421 = scmp.ne.s32.totalorder %s416, %s418
      %p422 = scmp.eq.s32.totalorder %s38, 0
      %p423 = por %p421, %p422
      %p424 = scmp.ne.s32.totalorder %s416, %s418
      %p425 = scmp.eq.s32.totalorder %s43, 1
      %p426 = por %p424, %p425
      %p427 = scmp.ne.s32.totalorder %s418, %s419
      %p428 = scmp.eq.s32.totalorder %s43, 0
      %p429 = por %p427, %p428
      %p430 = scmp.ne.s32.totalorder %s418, %s419
      %p431 = scmp.eq.s32.totalorder %s44, 1
      %p432 = por %p430, %p431
      %p434 = scmp.ne.s32.totalorder %s419, %s433
      %p435 = scmp.eq.s32.totalorder %s44, 0
      %p436 = por %p434, %p435
      %s438 = sadd.s32 %s437, 1
      %p441 = scmp.eq.s32.totalorder %s38, 1
      %p442 = scmp.ne.s32.totalorder %s437, %s439
      %p443 = scmp.eq.s32.totalorder %s38, 0
      %p444 = por %p442, %p443
      %p445 = scmp.ne.s32.totalorder %s437, %s439
      %p446 = scmp.eq.s32.totalorder %s43, 1
      %p447 = por %p445, %p446
      %p448 = scmp.ne.s32.totalorder %s439, %s440
      %p449 = scmp.eq.s32.totalorder %s43, 0
      %p450 = por %p448, %p449
      %p451 = scmp.ne.s32.totalorder %s439, %s440
      %p452 = scmp.eq.s32.totalorder %s44, 1
      %p453 = por %p451, %p452
      %p455 = scmp.ne.s32.totalorder %s440, %s454
      %p456 = scmp.eq.s32.totalorder %s44, 0
      %p457 = por %p455, %p456
      %s459 = sadd.s32 %s458, 1
      %p462 = scmp.eq.s32.totalorder %s38, 1
      %p463 = scmp.ne.s32.totalorder %s458, %s460
      %p464 = scmp.eq.s32.totalorder %s38, 0
      %p465 = por %p463, %p464
      %p466 = scmp.ne.s32.totalorder %s458, %s460
      %p467 = scmp.eq.s32.totalorder %s43, 1
      %p468 = por %p466, %p467
      %p469 = scmp.ne.s32.totalorder %s460, %s461
      %p470 = scmp.eq.s32.totalorder %s43, 0
      %p471 = por %p469, %p470
      %p472 = scmp.ne.s32.totalorder %s460, %s461
      %p473 = scmp.eq.s32.totalorder %s44, 1
      %p474 = por %p472, %p473
      %p476 = scmp.ne.s32.totalorder %s461, %s475
      %p477 = scmp.eq.s32.totalorder %s44, 0
      %p478 = por %p476, %p477
      %s480 = sadd.s32 %s479, 1
      %p483 = scmp.eq.s32.totalorder %s38, 1
      %p484 = scmp.ne.s32.totalorder %s479, %s481
      %p485 = scmp.eq.s32.totalorder %s38, 0
      %p486 = por %p484, %p485
      %p487 = scmp.ne.s32.totalorder %s479, %s481
      %p488 = scmp.eq.s32.totalorder %s43, 1
      %p489 = por %p487, %p488
      %p490 = scmp.ne.s32.totalorder %s481, %s482
      %p491 = scmp.eq.s32.totalorder %s43, 0
      %p492 = por %p490, %p491
      %p493 = scmp.ne.s32.totalorder %s481, %s482
      %p494 = scmp.eq.s32.totalorder %s44, 1
      %p495 = por %p493, %p494
      %p497 = scmp.ne.s32.totalorder %s482, %s496
      %p498 = scmp.eq.s32.totalorder %s44, 0
      %p499 = por %p497, %p498
      %s500 = ssub.s32 %s45, %s57
      %s501 = ssub.s32 %s46, %s53
      %s502 = sor.u32 %s500, %s501
      %p503 = scmp.eq.s32.totalorder %s502, 0
      %s505 = sadd.s32 %s504, 1
      %s506 = scalar_select %p503, %s504, %s505
      %p509 = pneg %p503
      %p510 = scmp.eq.s32.totalorder %s38, 1
      %p511 = por %p509, %p510
      %p512 = scmp.ne.s32.totalorder %s504, %s507
      %p513 = scmp.eq.s32.totalorder %s38, 0
      %p514 = por %p512, %p513
      %p515 = scmp.ne.s32.totalorder %s504, %s507
      %p516 = scmp.eq.s32.totalorder %s43, 1
      %p517 = por %p515, %p516
      %p518 = scmp.ne.s32.totalorder %s507, %s508
      %p519 = scmp.eq.s32.totalorder %s43, 0
      %p520 = por %p518, %p519
      %p521 = scmp.ne.s32.totalorder %s507, %s508
      %p522 = scmp.eq.s32.totalorder %s44, 1
      %p523 = por %p521, %p522
      %p525 = scmp.ne.s32.totalorder %s508, %s524
      %p526 = scmp.eq.s32.totalorder %s44, 0
      %p527 = por %p525, %p526
      %p528 = scmp.le.s32.totalorder 1, %s38
      %p529 = scmp.lt.s32.totalorder %s38, 3
      %p530 = pnand %p528, %p529
      %p531 = pneg %p530
      // Predicated region
      $region9: #{tpu_custom_call.1} parent=5 // pred_check
        _
      $region10: #{tpu_custom_call.1} parent=5 // pred_check_branch
        %533 = sbr.rel (%p530) target = $region12
      $region11: #{tpu_custom_call.1} parent=5 // pred_region
        %s534 = ssub.s32 %s38, 1
        // Predicated region
        $region13: #{tpu_custom_call.1} parent=11 // pred_check
          %p535 = pneg %p130
        $region14: #{tpu_custom_call.1} parent=11 // pred_check_branch
          %537 = sbr.rel (%p535) target = $region16
        $region15: #{tpu_custom_call.1} parent=11 // pred_region
          %s539 = ssub.s32 128, 128
          %540 = vsyncadd [#allocation4], %s539
          %s541 = smul.addr %s48, 128
          %s542 = scalar_lea.hbm %s2, %s541
          %s544 = sshll.u32 [#allocation3], 4
          %s545 = int_to_ptr.vmem [resolvable:$true] %s544
          %547 = dma.hbm_to_vmem [thread:$0]  %s542, 128, %s545, [#allocation4]
        $region16: #{tpu_custom_call.1} parent=11 // pred_fallthru
          _
        // Predicated region
        $region17: #{tpu_custom_call.1} parent=11 // pred_check
          %p548 = pneg %p177
        $region18: #{tpu_custom_call.1} parent=11 // pred_check_branch
          %550 = sbr.rel (%p548) target = $region20
        $region19: #{tpu_custom_call.1} parent=11 // pred_region
          %s552 = ssub.s32 16, 16
          %553 = vsyncadd [#allocation7], %s552
          %s555 = sshll.u32 [#allocation8], 4
          %s556 = int_to_ptr.vmem [resolvable:$true] %s555
          %558 = dma.hbm_to_vmem [thread:$0]  %s4, 16, %s556, [#allocation7]
        $region20: #{tpu_custom_call.1} parent=11 // pred_fallthru
          _
        // Predicated region
        $region21: #{tpu_custom_call.1} parent=11 // pred_check
          %p559 = pneg %p198
        $region22: #{tpu_custom_call.1} parent=11 // pred_check_branch
          %561 = sbr.rel (%p559) target = $region24
        $region23: #{tpu_custom_call.1} parent=11 // pred_region
          %s563 = ssub.s32 16, 16
          %564 = vsyncadd [#allocation10], %s563
          %s566 = sshll.u32 [#allocation9], 4
          %s567 = int_to_ptr.vmem [resolvable:$true] %s566
          %569 = dma.hbm_to_vmem [thread:$0]  %s5, 16, %s567, [#allocation10]
        $region24: #{tpu_custom_call.1} parent=11 // pred_fallthru
          _
        // Predicated region
        $region25: #{tpu_custom_call.1} parent=11 // pred_check
          %p570 = pneg %p219
        $region26: #{tpu_custom_call.1} parent=11 // pred_check_branch
          %572 = sbr.rel (%p570) target = $region28
        $region27: #{tpu_custom_call.1} parent=11 // pred_region
          _
        $region28: #{tpu_custom_call.1} parent=11 // pred_fallthru
          _
        // Predicated region
        $region29: #{tpu_custom_call.1} parent=11 // pred_check
          %p573 = pneg %p240
        $region30: #{tpu_custom_call.1} parent=11 // pred_check_branch
          %575 = sbr.rel (%p573) target = $region32
        $region31: #{tpu_custom_call.1} parent=11 // pred_region
          %s577 = ssub.s32 16, 16
          %578 = vsyncadd [#allocation10], %s577
          %s580 = sshll.u32 [#allocation11], 4
          %s581 = int_to_ptr.vmem [resolvable:$true] %s580
          %583 = dma.hbm_to_vmem [thread:$0]  %s7, 16, %s581, [#allocation10]
        $region32: #{tpu_custom_call.1} parent=11 // pred_fallthru
          _
        // Predicated region
        $region33: #{tpu_custom_call.1} parent=11 // pred_check
          %p584 = pneg %p261
        $region34: #{tpu_custom_call.1} parent=11 // pred_check_branch
          %586 = sbr.rel (%p584) target = $region36
        $region35: #{tpu_custom_call.1} parent=11 // pred_region
          _
        $region36: #{tpu_custom_call.1} parent=11 // pred_fallthru
          _
        // Predicated region
        $region37: #{tpu_custom_call.1} parent=11 // pred_check
          %p587 = pneg %p282
        $region38: #{tpu_custom_call.1} parent=11 // pred_check_branch
          %589 = sbr.rel (%p587) target = $region40
        $region39: #{tpu_custom_call.1} parent=11 // pred_region
          %s591 = ssub.s32 16, 16
          %592 = vsyncadd [#allocation13], %s591
          %s594 = sshll.u32 [#allocation12], 4
          %s595 = int_to_ptr.vmem [resolvable:$true] %s594
          %597 = dma.hbm_to_vmem [thread:$0]  %s9, 16, %s595, [#allocation13]
        $region40: #{tpu_custom_call.1} parent=11 // pred_fallthru
          _
        // Predicated region
        $region41: #{tpu_custom_call.1} parent=11 // pred_check
          %p598 = pneg %p303
        $region42: #{tpu_custom_call.1} parent=11 // pred_check_branch
          %600 = sbr.rel (%p598) target = $region44
        $region43: #{tpu_custom_call.1} parent=11 // pred_region
          _
        $region44: #{tpu_custom_call.1} parent=11 // pred_fallthru
          _
        // Predicated region
        $region45: #{tpu_custom_call.1} parent=11 // pred_check
          %p601 = pneg %p324
        $region46: #{tpu_custom_call.1} parent=11 // pred_check_branch
          %603 = sbr.rel (%p601) target = $region48
        $region47: #{tpu_custom_call.1} parent=11 // pred_region
          %s605 = ssub.s32 16, 16
          %606 = vsyncadd [#allocation13], %s605
          %s608 = sshll.u32 [#allocation14], 4
          %s609 = int_to_ptr.vmem [resolvable:$true] %s608
          %611 = dma.hbm_to_vmem [thread:$0]  %s11, 16, %s609, [#allocation13]
        $region48: #{tpu_custom_call.1} parent=11 // pred_fallthru
          _
        // Predicated region
        $region49: #{tpu_custom_call.1} parent=11 // pred_check
          %p612 = pneg %p345
        $region50: #{tpu_custom_call.1} parent=11 // pred_check_branch
          %614 = sbr.rel (%p612) target = $region52
        $region51: #{tpu_custom_call.1} parent=11 // pred_region
          _
        $region52: #{tpu_custom_call.1} parent=11 // pred_fallthru
          _
        // Predicated region
        $region53: #{tpu_custom_call.1} parent=11 // pred_check
          %p615 = pneg %p366
        $region54: #{tpu_custom_call.1} parent=11 // pred_check_branch
          %617 = sbr.rel (%p615) target = $region56
        $region55: #{tpu_custom_call.1} parent=11 // pred_region
          %s619 = ssub.s32 16, 16
          %620 = vsyncadd [#allocation16], %s619
          %s622 = sshll.u32 [#allocation15], 4
          %s623 = int_to_ptr.vmem [resolvable:$true] %s622
          %625 = dma.hbm_to_vmem [thread:$0]  %s13, 16, %s623, [#allocation16]
        $region56: #{tpu_custom_call.1} parent=11 // pred_fallthru
          _
        // Predicated region
        $region57: #{tpu_custom_call.1} parent=11 // pred_check
          %p626 = pneg %p387
        $region58: #{tpu_custom_call.1} parent=11 // pred_check_branch
          %628 = sbr.rel (%p626) target = $region60
        $region59: #{tpu_custom_call.1} parent=11 // pred_region
          %s630 = ssub.s32 16, 16
          %631 = vsyncadd [#allocation16], %s630
          %s633 = sshll.u32 [#allocation17], 4
          %s634 = int_to_ptr.vmem [resolvable:$true] %s633
          %636 = dma.hbm_to_vmem [thread:$0]  %s14, 16, %s634, [#allocation16]
        $region60: #{tpu_custom_call.1} parent=11 // pred_fallthru
          _
        // Predicated region
        $region61: #{tpu_custom_call.1} parent=11 // pred_check
          %p637 = pneg %p408
        $region62: #{tpu_custom_call.1} parent=11 // pred_check_branch
          %639 = sbr.rel (%p637) target = $region64
        $region63: #{tpu_custom_call.1} parent=11 // pred_region
          %s641 = ssub.s32 16, 16
          %642 = vsyncadd [#allocation19], %s641
          %s644 = sshll.u32 [#allocation18], 4
          %s645 = int_to_ptr.vmem [resolvable:$true] %s644
          %647 = dma.hbm_to_vmem [thread:$0]  %s15, 16, %s645, [#allocation19]
        $region64: #{tpu_custom_call.1} parent=11 // pred_fallthru
          _
        // Predicated region
        $region65: #{tpu_custom_call.1} parent=11 // pred_check
          %p648 = pneg %p429
        $region66: #{tpu_custom_call.1} parent=11 // pred_check_branch
          %650 = sbr.rel (%p648) target = $region68
        $region67: #{tpu_custom_call.1} parent=11 // pred_region
          %s652 = ssub.s32 256, 256
          %653 = vsyncadd [#allocation19], %s652
          %s654 = sshll.u32 [#allocation20], 4
          %s655 = int_to_ptr.vmem [resolvable:$true] %s654
          %660 = dma.hbm_to_vmem [thread:$0]  %s16, 256, %s655, [#allocation19], 64, 64, 4
        $region68: #{tpu_custom_call.1} parent=11 // pred_fallthru
          _
        // Predicated region
        $region69: #{tpu_custom_call.1} parent=11 // pred_check
          %p661 = pneg %p450
        $region70: #{tpu_custom_call.1} parent=11 // pred_check_branch
          %663 = sbr.rel (%p661) target = $region72
        $region71: #{tpu_custom_call.1} parent=11 // pred_region
          %s665 = ssub.s32 16, 16
          %666 = vsyncadd [#allocation22], %s665
          %s668 = sshll.u32 [#allocation21], 4
          %s669 = int_to_ptr.vmem [resolvable:$true] %s668
          %671 = dma.hbm_to_vmem [thread:$0]  %s17, 16, %s669, [#allocation22]
        $region72: #{tpu_custom_call.1} parent=11 // pred_fallthru
          _
        // Predicated region
        $region73: #{tpu_custom_call.1} parent=11 // pred_check
          %p672 = pneg %p471
        $region74: #{tpu_custom_call.1} parent=11 // pred_check_branch
          %674 = sbr.rel (%p672) target = $region76
        $region75: #{tpu_custom_call.1} parent=11 // pred_region
          _
        $region76: #{tpu_custom_call.1} parent=11 // pred_fallthru
          _
        // Predicated region
        $region77: #{tpu_custom_call.1} parent=11 // pred_check
          %p675 = pneg %p492
        $region78: #{tpu_custom_call.1} parent=11 // pred_check_branch
          %677 = sbr.rel (%p675) target = $region80
        $region79: #{tpu_custom_call.1} parent=11 // pred_region
          _
        $region80: #{tpu_custom_call.1} parent=11 // pred_fallthru
          _
      $region12: #{tpu_custom_call.1} parent=5 // pred_fallthru
        _
      %p678 = scmp.lt.s32.totalorder %s38, 2
      // Predicated region
      $region81: #{tpu_custom_call.1} parent=5 // pred_check
        %p679 = pneg %p678
      $region82: #{tpu_custom_call.1} parent=5 // pred_check_branch
        %681 = sbr.rel (%p679) target = $region84
      $region83: #{tpu_custom_call.1} parent=5 // pred_region
        // Predicated region
        $region85: #{tpu_custom_call.1} parent=83 // pred_check
          %p682 = pneg %p72
        $region86: #{tpu_custom_call.1} parent=83 // pred_check_branch
          %684 = sbr.rel (%p682) target = $region88
        $region87: #{tpu_custom_call.1} parent=83 // pred_region
          %p685 = scmp.lt.s32.totalorder %s45, 1
          %s686 = scalar_select %p685, %s45, 1
          %p687 = scmp.lt.s32.totalorder %s46, 0
          %s688 = scalar_select %p687, %s46, 0
          %s689 = sadd.s32 %s688, %s686
          %s690 = smul.addr %s689, 8
          %s691 = scalar_lea.vmem %s0, %s690
        $region88: #{tpu_custom_call.1} parent=83 // pred_fallthru
          _
        // Predicated region
        $region89: #{tpu_custom_call.1} parent=83 // pred_check
          %p692 = pneg %p98
        $region90: #{tpu_custom_call.1} parent=83 // pred_check_branch
          %694 = sbr.rel (%p692) target = $region92
        $region91: #{tpu_custom_call.1} parent=83 // pred_region
          %p695 = scmp.lt.s32.totalorder %s45, 1
          %s696 = scalar_select %p695, %s45, 1
          %s697 = smul.addr %s696, 8
          %s698 = scalar_lea.vmem %s1, %s697
        $region92: #{tpu_custom_call.1} parent=83 // pred_fallthru
          _
        // Predicated region
        $region93: #{tpu_custom_call.1} parent=83 // pred_check
          %p699 = pneg %p150
        $region94: #{tpu_custom_call.1} parent=83 // pred_check_branch
          %701 = sbr.rel (%p699) target = $region96
        $region95: #{tpu_custom_call.1} parent=83 // pred_region
          %s702 = sand.u32 %s38, 1
          %s703 = scalar_lea.sflag [#allocation7], %s702
          %s704 = sand.u32 %s140, 1
          %s705 = scalar_lea.vmem [#allocation6], %s704
          %s707 = ssub.s32 16, 16
          %708 = vsyncadd %s703, %s707
          %s709 = smul.addr %s45, 16
          %s710 = scalar_lea.hbm %s3, %s709
          %s712 = sshll.u32 %s705, 4
          %s713 = int_to_ptr.vmem [resolvable:$true] %s712
          %715 = dma.hbm_to_vmem [thread:$0]  %s710, 16, %s713, %s703
        $region96: #{tpu_custom_call.1} parent=83 // pred_fallthru
          _
      $region84: #{tpu_custom_call.1} parent=5 // pred_fallthru
        _
      %p716 = scmp.le.s32.totalorder 1, %s38
      %p717 = scmp.lt.s32.totalorder %s38, 3
      %p718 = pnand %p716, %p717
      %p719 = pneg %p718
      // Predicated region
      $region97: #{tpu_custom_call.1} parent=5 // pred_check
        _
      $region98: #{tpu_custom_call.1} parent=5 // pred_check_branch
        %721 = sbr.rel (%p718) target = $region100
      $region99: #{tpu_custom_call.1} parent=5 // pred_region
        %s722 = ssub.s32 %s38, 1
        // Predicated region
        $region101: #{tpu_custom_call.1} parent=99 // pred_check
          %p723 = pneg %p130
        $region102: #{tpu_custom_call.1} parent=99 // pred_check_branch
          %725 = sbr.rel (%p723) target = $region104
        $region103: #{tpu_custom_call.1} parent=99 // pred_region
          %726 = dma.done [#allocation4], 128
        $region104: #{tpu_custom_call.1} parent=99 // pred_fallthru
          _
        %s727 = sand.u32 %s43, 1
        %s728 = scalar_lea.sflag [#allocation7], %s727
        %s729 = sand.u32 %s143, 1
        %s730 = scalar_lea.vmem [#allocation6], %s729
        // Predicated region
        $region105: #{tpu_custom_call.1} parent=99 // pred_check
          %p731 = pneg %p156
        $region106: #{tpu_custom_call.1} parent=99 // pred_check_branch
          %733 = sbr.rel (%p731) target = $region108
        $region107: #{tpu_custom_call.1} parent=99 // pred_region
          %734 = dma.done %s728, 16
        $region108: #{tpu_custom_call.1} parent=99 // pred_fallthru
          _
        // Predicated region
        $region109: #{tpu_custom_call.1} parent=99 // pred_check
          %p735 = pneg %p177
        $region110: #{tpu_custom_call.1} parent=99 // pred_check_branch
          %737 = sbr.rel (%p735) target = $region112
        $region111: #{tpu_custom_call.1} parent=99 // pred_region
          %738 = dma.done [#allocation7], 16
        $region112: #{tpu_custom_call.1} parent=99 // pred_fallthru
          _
        // Predicated region
        $region113: #{tpu_custom_call.1} parent=99 // pred_check
          %p739 = pneg %p198
        $region114: #{tpu_custom_call.1} parent=99 // pred_check_branch
          %741 = sbr.rel (%p739) target = $region116
        $region115: #{tpu_custom_call.1} parent=99 // pred_region
          %742 = dma.done [#allocation10], 16
        $region116: #{tpu_custom_call.1} parent=99 // pred_fallthru
          _
        // Predicated region
        $region117: #{tpu_custom_call.1} parent=99 // pred_check
          %p743 = pneg %p240
        $region118: #{tpu_custom_call.1} parent=99 // pred_check_branch
          %745 = sbr.rel (%p743) target = $region120
        $region119: #{tpu_custom_call.1} parent=99 // pred_region
          %746 = dma.done [#allocation10], 16
        $region120: #{tpu_custom_call.1} parent=99 // pred_fallthru
          _
        // Predicated region
        $region121: #{tpu_custom_call.1} parent=99 // pred_check
          %p747 = pneg %p282
        $region122: #{tpu_custom_call.1} parent=99 // pred_check_branch
          %749 = sbr.rel (%p747) target = $region124
        $region123: #{tpu_custom_call.1} parent=99 // pred_region
          %750 = dma.done [#allocation13], 16
        $region124: #{tpu_custom_call.1} parent=99 // pred_fallthru
          _
        // Predicated region
        $region125: #{tpu_custom_call.1} parent=99 // pred_check
          %p751 = pneg %p324
        $region126: #{tpu_custom_call.1} parent=99 // pred_check_branch
          %753 = sbr.rel (%p751) target = $region128
        $region127: #{tpu_custom_call.1} parent=99 // pred_region
          %754 = dma.done [#allocation13], 16
        $region128: #{tpu_custom_call.1} parent=99 // pred_fallthru
          _
        // Predicated region
        $region129: #{tpu_custom_call.1} parent=99 // pred_check
          %p755 = pneg %p366
        $region130: #{tpu_custom_call.1} parent=99 // pred_check_branch
          %757 = sbr.rel (%p755) target = $region132
        $region131: #{tpu_custom_call.1} parent=99 // pred_region
          %758 = dma.done [#allocation16], 16
        $region132: #{tpu_custom_call.1} parent=99 // pred_fallthru
          _
        // Predicated region
        $region133: #{tpu_custom_call.1} parent=99 // pred_check
          %p759 = pneg %p387
        $region134: #{tpu_custom_call.1} parent=99 // pred_check_branch
          %761 = sbr.rel (%p759) target = $region136
        $region135: #{tpu_custom_call.1} parent=99 // pred_region
          %762 = dma.done [#allocation16], 16
        $region136: #{tpu_custom_call.1} parent=99 // pred_fallthru
          _
        // Predicated region
        $region137: #{tpu_custom_call.1} parent=99 // pred_check
          %p763 = pneg %p408
        $region138: #{tpu_custom_call.1} parent=99 // pred_check_branch
          %765 = sbr.rel (%p763) target = $region140
        $region139: #{tpu_custom_call.1} parent=99 // pred_region
          %766 = dma.done [#allocation19], 16
        $region140: #{tpu_custom_call.1} parent=99 // pred_fallthru
          _
        // Predicated region
        $region141: #{tpu_custom_call.1} parent=99 // pred_check
          %p767 = pneg %p429
        $region142: #{tpu_custom_call.1} parent=99 // pred_check_branch
          %769 = sbr.rel (%p767) target = $region144
        $region143: #{tpu_custom_call.1} parent=99 // pred_region
          %770 = dma.done [#allocation19], 256
        $region144: #{tpu_custom_call.1} parent=99 // pred_fallthru
          _
        // Predicated region
        $region145: #{tpu_custom_call.1} parent=99 // pred_check
          %p771 = pneg %p450
        $region146: #{tpu_custom_call.1} parent=99 // pred_check_branch
          %773 = sbr.rel (%p771) target = $region148
        $region147: #{tpu_custom_call.1} parent=99 // pred_region
          %774 = dma.done [#allocation22], 16
        $region148: #{tpu_custom_call.1} parent=99 // pred_fallthru
          _
        %p775 = scmp.lt.s32.totalorder %s47, 1
        %s776 = scalar_select %p775, %s47, 1
        %p777 = scmp.lt.s32.totalorder %s48, 0
        %s778 = scalar_select %p777, %s48, 0
        %s779 = sadd.s32 %s778, %s776
        %s780 = smul.addr %s779, 8
        %s781 = scalar_lea.vmem %s0, %s780
        %p782 = pneg %p78
        %p783 = pneg %p75
        %p784 = scmp.lt.s32.totalorder %s47, 1
        %s785 = scalar_select %p784, %s47, 1
        %s786 = smul.addr %s785, 8
        %s787 = scalar_lea.vmem %s1, %s786
        %p788 = pneg %p104
        %p789 = pneg %p101
        %p790 = pneg %p130
        %p791 = pneg %p127
        %s792 = sand.u32 %s43, 1
        %s793 = scalar_lea.sflag [#allocation7], %s792
        %s794 = sand.u32 %s143, 1
        %s795 = scalar_lea.vmem [#allocation6], %s794
        %p796 = pneg %p156
        %p797 = pneg %p153
        %p798 = pneg %p177
        %p799 = pneg %p174
        %p800 = pneg %p198
        %p801 = pneg %p195
        %p802 = pneg %p219
        %p803 = pneg %p216
        %p804 = pneg %p240
        %p805 = pneg %p237
        %p806 = pneg %p261
        %p807 = pneg %p258
        %p808 = pneg %p282
        %p809 = pneg %p279
        %p810 = pneg %p303
        %p811 = pneg %p300
        %p812 = pneg %p324
        %p813 = pneg %p321
        %p814 = pneg %p345
        %p815 = pneg %p342
        %p816 = pneg %p366
        %p817 = pneg %p363
        %p818 = pneg %p387
        %p819 = pneg %p384
        %p820 = pneg %p408
        %p821 = pneg %p405
        %p822 = pneg %p429
        %p823 = pneg %p426
        %p824 = pneg %p450
        %p825 = pneg %p447
        %p826 = pneg %p471
        %p827 = pneg %p468
        %p828 = pneg %p492
        %p829 = pneg %p489
        %p830 = pneg %p520
        %p831 = pneg %p517
        %s832 = sand.u32 %s507, 1
        %s833 = scalar_lea.sflag [#allocation5], %s832
        %s834 = sand.u32 %s507, 1
        %s835 = smul.addr %s834, 8
        %s836 = scalar_lea.vmem [#allocation23], %s835
        %p837 = scmp.lt.s32.totalorder %s47, 1
        %s838 = scalar_select %p837, %s47, 1
        %p839 = scmp.lt.s32.totalorder %s48, 0
        %s840 = scalar_select %p839, %s48, 0
        %s841 = sadd.s32 %s840, %s838
        %s842 = smul.addr %s841, 8
        %s843 = scalar_lea.vmem %s0, %s842
        %p844 = scmp.lt.s32.totalorder %s47, 1
        %s845 = scalar_select %p844, %s47, 1
        %s846 = smul.addr %s845, 8
        %s847 = scalar_lea.vmem %s1, %s846
        %v849 = vld [vmem:[%s843] sm:$0xff]
        %v850 = vld [vmem:[%s847] sm:$0xff]
        %v851 = vld [vmem:[#allocation8] sm:$0x1]
        %v852 = vld [vmem:[#allocation9] sm:$0x1]
        %v853 = vld [vmem:[#allocation17] sm:$0x1]
        %v854 = vld [vmem:[#allocation18] sm:$0x1]
        %v855 = vld [vmem:[#allocation11] sm:$0x1]
        %v856 = vld [vmem:[#allocation12] sm:$0x1]
        %v857 = vld [vmem:[#allocation14] sm:$0x1]
        %v858 = vld [vmem:[#allocation15] sm:$0x1]
        %v859 = vld [vmem:[#allocation21] sm:$0x1]
        %v860 = vld [vmem:[%s19] sm:$0x1]
        %vm861 = vcmask 261120
        %v862 = vsel %vm861, %v849, 0.0
        %863 = vadd.xlane.f32.xlu0 %v862
        %v864 = vpop.xlane.xlu0 %863
        %v865 = vrcp.pop 32.0
        %v866 = vmul.f32 %v864, %v865
        %v867 = vsub.f32 %v849, %v866
        %v868 = vmul.f32 %v867, %v867
        %v869 = vsel %vm861, %v868, 0.0
        %870 = vadd.xlane.f32.xlu0 %v869
        %v871 = vpop.xlane.xlu0 %870
        %v872 = vmul.f32 %v871, %v865
        %v873 = vadd.f32 %v872, 1e-05
        %v874 = vrsqrt.pop %v873
        %v875 = vmul.f32 %v867, %v874
        %v877 = vlaneseq
        %v878 = vshrl.u32 %v877, 7
        %v879 = vsub.s32 0, %v878
        %v880 = vrot.slane %v851, %v879
        %v882 = vmul.f32 %v875, %v880
        %v884 = vlaneseq
        %v885 = vshrl.u32 %v884, 7
        %v886 = vsub.s32 0, %v885
        %v887 = vrot.slane %v852, %v886
        %v889 = vadd.f32 %v882, %v887
        %v890 = vpack.c.bf16 %v889, %v889
        %v891 = vsel %vm861, %v850, 0.0
        %892 = vadd.xlane.f32.xlu0 %v891
        %v893 = vpop.xlane.xlu0 %892
        %v894 = vmul.f32 %v893, %v865
        %v895 = vsub.f32 %v850, %v894
        %v896 = vmul.f32 %v895, %v895
        %v897 = vsel %vm861, %v896, 0.0
        %898 = vadd.xlane.f32.xlu0 %v897
        %v899 = vpop.xlane.xlu0 %898
        %v900 = vmul.f32 %v899, %v865
        %v901 = vadd.f32 %v900, 1e-05
        %v902 = vrsqrt.pop %v901
        %v903 = vmul.f32 %v895, %v902
        %v904 = vmul.f32 %v903, %v880
        %v905 = vadd.f32 %v904, %v887
        %v906 = vpack.c.bf16 %v905, %v905
        %v907 = vld [vmem:[%s6] sm:$0xf]
        %v908 = vld [vmem:[%s6 + $0x4] sm:$0xf]
        %v909 = vld [vmem:[%s6 + $0x8] sm:$0xf]
        %v910 = vld [vmem:[%s6 + $0xc] sm:$0xf]
        %v912 = vlaneseq
        %v913 = vshrl.u32 %v912, 7
        %v914 = vsub.s32 0, %v913
        %v915 = vrot.slane %v855, %v914
        %v921 = vunpack.c.l.b16 %v907
        %v922 = vunpack.c.l.b16 %v908
        %v923 = vunpack.c.l.b16 %v909
        %v924 = vunpack.c.l.b16 %v910
        %v925 = vpack.c.b16 %v922, %v921
        %v926 = vpack.c.b16 %v924, %v923
        %v930 = vsel %vm861, %v890, 0
        %932 = vmatprep.subr.bf16.mxu0 0
        %933 = vmatpush1.bf16.msra.mxu0 0
        %934 = vmatprep.subr.bf16.mxu0 0
        %935 = vmatpush1.bf16.msra.mxu0 0
        %936 = vmatprep.subr.bf16.mxu0 0
        %937 = vmatpush1.bf16.msra.mxu0 0
        %938 = vmatprep.subr.bf16.mxu0 0
        %939 = vmatpush1.bf16.msra.mxu0 0
        %940 = vmatprep.subr.bf16.mxu0 0
        %941 = vmatpush1.bf16.msra.mxu0 0
        %942 = vmatprep.subr.bf16.mxu0 0
        %943 = vmatpush1.bf16.msra.mxu0 0
        %944 = vmatprep.subr.bf16.mxu0 0
        %945 = vmatpush1.bf16.msra.mxu0 %v926
        %946 = vmatprep.subr.bf16.mxu0 0
        %947 = vmatpush1.bf16.msra.mxu0 %v925
        %948 = vmatprep.subr.bf16.mxu0 0
        %949 = vmatpush2.bf16.msra.mxu0 0
        %950 = vmatprep.subr.bf16.mxu0 0
        %951 = vmatpush2.bf16.msra.mxu0 0
        %952 = vmatprep.subr.bf16.mxu0 0
        %953 = vmatpush2.bf16.msra.mxu0 0
        %954 = vmatprep.subr.bf16.mxu0 0
        %955 = vmatpush2.bf16.msra.mxu0 0
        %956 = vmatprep.subr.bf16.mxu0 0
        %957 = vmatpush2.bf16.msra.mxu0 0
        %958 = vmatprep.subr.bf16.mxu0 0
        %959 = vmatpush2.bf16.msra.mxu0 0
        %960 = vmatprep.subr.bf16.mxu0 0
        %961 = vmatpush2.bf16.msra.mxu0 0
        %962 = vmatprep.subr.bf16.mxu0 0
        %963 = vmatpush2.bf16.msra.mxu0 0
        %964 = vmatprep.mubr.bf16.mxu0 0
        %965 = vmatmul.mubr.bf16.gmra.mxu0 %v930
        %v966 = vpop.f32.mrf.mxu0
        %v967 = vadd.f32 %v915, %v966
        %v968 = vpop.f32.mrf.mxu0
        %v969 = vpop.f32.mrf.mxu0
        %v970 = vpop.f32.mrf.mxu0
        %971 = vdwg.mxu0
        %v972 = vld [vmem:[%s8] sm:$0xf]
        %v973 = vld [vmem:[%s8 + $0x4] sm:$0xf]
        %v974 = vld [vmem:[%s8 + $0x8] sm:$0xf]
        %v975 = vld [vmem:[%s8 + $0xc] sm:$0xf]
        %v977 = vlaneseq
        %v978 = vshrl.u32 %v977, 7
        %v979 = vsub.s32 0, %v978
        %v980 = vrot.slane %v856, %v979
        %v986 = vunpack.c.l.b16 %v972
        %v987 = vunpack.c.l.b16 %v973
        %v988 = vunpack.c.l.b16 %v974
        %v989 = vunpack.c.l.b16 %v975
        %v990 = vpack.c.b16 %v987, %v986
        %v991 = vpack.c.b16 %v989, %v988
        %v995 = vsel %vm861, %v906, 0
        %997 = vmatprep.subr.bf16.mxu0 0
        %998 = vmatpush1.bf16.msra.mxu0 0
        %999 = vmatprep.subr.bf16.mxu0 0
        %1000 = vmatpush1.bf16.msra.mxu0 0
        %1001 = vmatprep.subr.bf16.mxu0 0
        %1002 = vmatpush1.bf16.msra.mxu0 0
        %1003 = vmatprep.subr.bf16.mxu0 0
        %1004 = vmatpush1.bf16.msra.mxu0 0
        %1005 = vmatprep.subr.bf16.mxu0 0
        %1006 = vmatpush1.bf16.msra.mxu0 0
        %1007 = vmatprep.subr.bf16.mxu0 0
        %1008 = vmatpush1.bf16.msra.mxu0 0
        %1009 = vmatprep.subr.bf16.mxu0 0
        %1010 = vmatpush1.bf16.msra.mxu0 %v991
        %1011 = vmatprep.subr.bf16.mxu0 0
        %1012 = vmatpush1.bf16.msra.mxu0 %v990
        %1013 = vmatprep.subr.bf16.mxu0 0
        %1014 = vmatpush2.bf16.msra.mxu0 0
        %1015 = vmatprep.subr.bf16.mxu0 0
        %1016 = vmatpush2.bf16.msra.mxu0 0
        %1017 = vmatprep.subr.bf16.mxu0 0
        %1018 = vmatpush2.bf16.msra.mxu0 0
        %1019 = vmatprep.subr.bf16.mxu0 0
        %1020 = vmatpush2.bf16.msra.mxu0 0
        %1021 = vmatprep.subr.bf16.mxu0 0
        %1022 = vmatpush2.bf16.msra.mxu0 0
        %1023 = vmatprep.subr.bf16.mxu0 0
        %1024 = vmatpush2.bf16.msra.mxu0 0
        %1025 = vmatprep.subr.bf16.mxu0 0
        %1026 = vmatpush2.bf16.msra.mxu0 0
        %1027 = vmatprep.subr.bf16.mxu0 0
        %1028 = vmatpush2.bf16.msra.mxu0 0
        %1029 = vmatprep.mubr.bf16.mxu0 0
        %1030 = vmatmul.mubr.bf16.gmra.mxu0 %v995
        %v1031 = vpop.f32.mrf.mxu0
        %v1032 = vadd.f32 %v980, %v1031
        %v1033 = vpop.f32.mrf.mxu0
        %v1034 = vpop.f32.mrf.mxu0
        %v1035 = vpop.f32.mrf.mxu0
        %1036 = vdwg.mxu0
        %v1037 = vld [vmem:[%s10] sm:$0xf]
        %v1038 = vld [vmem:[%s10 + $0x4] sm:$0xf]
        %v1039 = vld [vmem:[%s10 + $0x8] sm:$0xf]
        %v1040 = vld [vmem:[%s10 + $0xc] sm:$0xf]
        %v1042 = vlaneseq
        %v1043 = vshrl.u32 %v1042, 7
        %v1044 = vsub.s32 0, %v1043
        %v1045 = vrot.slane %v857, %v1044
        %v1051 = vunpack.c.l.b16 %v1037
        %v1052 = vunpack.c.l.b16 %v1038
        %v1053 = vunpack.c.l.b16 %v1039
        %v1054 = vunpack.c.l.b16 %v1040
        %v1055 = vpack.c.b16 %v1052, %v1051
        %v1056 = vpack.c.b16 %v1054, %v1053
        %1059 = vmatprep.subr.bf16.mxu0 0
        %1060 = vmatpush1.bf16.msra.mxu0 0
        %1061 = vmatprep.subr.bf16.mxu0 0
        %1062 = vmatpush1.bf16.msra.mxu0 0
        %1063 = vmatprep.subr.bf16.mxu0 0
        %1064 = vmatpush1.bf16.msra.mxu0 0
        %1065 = vmatprep.subr.bf16.mxu0 0
        %1066 = vmatpush1.bf16.msra.mxu0 0
        %1067 = vmatprep.subr.bf16.mxu0 0
        %1068 = vmatpush1.bf16.msra.mxu0 0
        %1069 = vmatprep.subr.bf16.mxu0 0
        %1070 = vmatpush1.bf16.msra.mxu0 0
        %1071 = vmatprep.subr.bf16.mxu0 0
        %1072 = vmatpush1.bf16.msra.mxu0 %v1056
        %1073 = vmatprep.subr.bf16.mxu0 0
        %1074 = vmatpush1.bf16.msra.mxu0 %v1055
        %1075 = vmatprep.subr.bf16.mxu0 0
        %1076 = vmatpush2.bf16.msra.mxu0 0
        %1077 = vmatprep.subr.bf16.mxu0 0
        %1078 = vmatpush2.bf16.msra.mxu0 0
        %1079 = vmatprep.subr.bf16.mxu0 0
        %1080 = vmatpush2.bf16.msra.mxu0 0
        %1081 = vmatprep.subr.bf16.mxu0 0
        %1082 = vmatpush2.bf16.msra.mxu0 0
        %1083 = vmatprep.subr.bf16.mxu0 0
        %1084 = vmatpush2.bf16.msra.mxu0 0
        %1085 = vmatprep.subr.bf16.mxu0 0
        %1086 = vmatpush2.bf16.msra.mxu0 0
        %1087 = vmatprep.subr.bf16.mxu0 0
        %1088 = vmatpush2.bf16.msra.mxu0 0
        %1089 = vmatprep.subr.bf16.mxu0 0
        %1090 = vmatpush2.bf16.msra.mxu0 0
        %1091 = vmatprep.mubr.bf16.mxu0 0
        %1092 = vmatmul.mubr.bf16.gmra.mxu0 %v995
        %v1093 = vpop.f32.mrf.mxu0
        %v1094 = vadd.f32 %v1045, %v1093
        %v1095 = vpop.f32.mrf.mxu0
        %v1096 = vpop.f32.mrf.mxu0
        %v1097 = vpop.f32.mrf.mxu0
        %1098 = vdwg.mxu0
        %v1099 = vld [vmem:[#allocation3] sm:$0xff]
        %v1100 = vld [vmem:[%s730] sm:$0x1]
        %v1102 = vlaneseq
        %v1103 = vshrl.u32 %v1102, 7
        %v1104 = vsub.s32 0, %v1103
        %v1105 = vrot.slane %v1100, %v1104
        %v1107 = vadd.f32 %v1099, %v1105
        %v1108 = vpack.c.bf16 %v967, %v967
        %v1109 = vpack.c.bf16 %v1032, %v1032
        %v1110 = vpack.c.bf16 %v1094, %v1094
        %vm1111 = vcmask 64512
        %v1113 = vsel %vm1111, %v1108, 0
        %v1116 = vsel %vm1111, %v1109, 0
        %1118 = vmatprep.subr.bf16.mxu0 0
        %1119 = vmatpush1.bf16.xpose.msra.mxu0 0
        %1120 = vmatprep.subr.bf16.mxu0 0
        %1121 = vmatpush1.bf16.xpose.msra.mxu0 0
        %1122 = vmatprep.subr.bf16.mxu0 0
        %1123 = vmatpush1.bf16.xpose.msra.mxu0 0
        %1124 = vmatprep.subr.bf16.mxu0 0
        %1125 = vmatpush1.bf16.xpose.msra.mxu0 0
        %1126 = vmatprep.subr.bf16.mxu0 0
        %1127 = vmatpush1.bf16.xpose.msra.mxu0 0
        %1128 = vmatprep.subr.bf16.mxu0 0
        %1129 = vmatpush1.bf16.xpose.msra.mxu0 0
        %1130 = vmatprep.subr.bf16.mxu0 0
        %1131 = vmatpush1.bf16.xpose.msra.mxu0 0
        %1132 = vmatprep.subr.bf16.mxu0 0
        %1133 = vmatpush1.bf16.xpose.msra.mxu0 %v1116
        %1134 = vmatprep.subr.bf16.mxu0 0
        %1135 = vmatpush2.bf16.xpose.msra.mxu0 0
        %1136 = vmatprep.subr.bf16.mxu0 0
        %1137 = vmatpush2.bf16.xpose.msra.mxu0 0
        %1138 = vmatprep.subr.bf16.mxu0 0
        %1139 = vmatpush2.bf16.xpose.msra.mxu0 0
        %1140 = vmatprep.subr.bf16.mxu0 0
        %1141 = vmatpush2.bf16.xpose.msra.mxu0 0
        %1142 = vmatprep.subr.bf16.mxu0 0
        %1143 = vmatpush2.bf16.xpose.msra.mxu0 0
        %1144 = vmatprep.subr.bf16.mxu0 0
        %1145 = vmatpush2.bf16.xpose.msra.mxu0 0
        %1146 = vmatprep.subr.bf16.mxu0 0
        %1147 = vmatpush2.bf16.xpose.msra.mxu0 0
        %1148 = vmatprep.subr.bf16.mxu0 0
        %1149 = vmatpush2.bf16.xpose.msra.mxu0 0
        %1150 = vmatprep.mubr.bf16.mxu0 0
        %1151 = vmatmul.mubr.bf16.gmra.mxu0 %v1113
        %v1152 = vpop.f32.mrf.mxu0
        %v1153 = vadd.f32 %v1107, %v1152
        %v1154 = vpop.f32.mrf.mxu0
        %v1155 = vpop.f32.mrf.mxu0
        %v1156 = vpop.f32.mrf.mxu0
        %1157 = vdwg.mxu0
        %v1158 = vsel %vm1111, %v1153, -inf
        %1159 = vmax.xlane.f32.xlu0 %v1158
        %v1160 = vpop.xlane.xlu0 %1159
        %v1161 = vsub.f32 %v1153, %v1160
        %v1162 = vmul.f32 %v1161, 1.442695
        %v1163 = vpow.pop %v1162
        %v1164 = vsel %vm1111, %v1163, 0.0
        %1165 = vadd.xlane.f32.xlu0 %v1164
        %v1166 = vpop.xlane.xlu0 %1165
        %v1167 = vrcp.pop %v1166
        %v1168 = vmul.f32 %v1163, %v1167
        %v1169 = vpack.c.bf16 %v1168, %v1168
        %v1171 = vsel %vm1111, %v1169, 0
        %vm1173 = vcmask 1043456
        %v1175 = vsel %vm1173, %v1110, 0
        %1177 = vmatprep.subr.bf16.mxu0 0
        %1178 = vmatpush1.bf16.msra.mxu0 0
        %1179 = vmatprep.subr.bf16.mxu0 0
        %1180 = vmatpush1.bf16.msra.mxu0 0
        %1181 = vmatprep.subr.bf16.mxu0 0
        %1182 = vmatpush1.bf16.msra.mxu0 0
        %1183 = vmatprep.subr.bf16.mxu0 0
        %1184 = vmatpush1.bf16.msra.mxu0 0
        %1185 = vmatprep.subr.bf16.mxu0 0
        %1186 = vmatpush1.bf16.msra.mxu0 0
        %1187 = vmatprep.subr.bf16.mxu0 0
        %1188 = vmatpush1.bf16.msra.mxu0 0
        %1189 = vmatprep.subr.bf16.mxu0 0
        %1190 = vmatpush1.bf16.msra.mxu0 0
        %1191 = vmatprep.subr.bf16.mxu0 0
        %1192 = vmatpush1.bf16.msra.mxu0 %v1175
        %1193 = vmatprep.subr.bf16.mxu0 0
        %1194 = vmatpush2.bf16.msra.mxu0 0
        %1195 = vmatprep.subr.bf16.mxu0 0
        %1196 = vmatpush2.bf16.msra.mxu0 0
        %1197 = vmatprep.subr.bf16.mxu0 0
        %1198 = vmatpush2.bf16.msra.mxu0 0
        %1199 = vmatprep.subr.bf16.mxu0 0
        %1200 = vmatpush2.bf16.msra.mxu0 0
        %1201 = vmatprep.subr.bf16.mxu0 0
        %1202 = vmatpush2.bf16.msra.mxu0 0
        %1203 = vmatprep.subr.bf16.mxu0 0
        %1204 = vmatpush2.bf16.msra.mxu0 0
        %1205 = vmatprep.subr.bf16.mxu0 0
        %1206 = vmatpush2.bf16.msra.mxu0 0
        %1207 = vmatprep.subr.bf16.mxu0 0
        %1208 = vmatpush2.bf16.msra.mxu0 0
        %1209 = vmatprep.mubr.bf16.mxu0 0
        %1210 = vmatmul.mubr.bf16.gmra.mxu0 %v1171
        %v1211 = vpop.f32.mrf.mxu0
        %v1212 = vadd.f32 0.0, %v1211
        %v1213 = vpop.f32.mrf.mxu0
        %v1214 = vpop.f32.mrf.mxu0
        %v1215 = vpop.f32.mrf.mxu0
        %1216 = vdwg.mxu0
        %1217 = vst.msk [vmem:[#allocation2] sm:$0xff] %vm1111, %v1212
        %1219 = vrot.lane.b32.xlu0 %v1108, 120
        %v1220 = vpop.permute.xlu0 %1219
        %1222 = vrot.lane.b32.xlu0 %v1109, 120
        %v1223 = vpop.permute.xlu0 %1222
        %v1225 = vsel %vm1111, %v1220, 0
        %v1228 = vsel %vm1111, %v1223, 0
        %1230 = vmatprep.subr.bf16.mxu0 0
        %1231 = vmatpush1.bf16.xpose.msra.mxu0 0
        %1232 = vmatprep.subr.bf16.mxu0 0
        %1233 = vmatpush1.bf16.xpose.msra.mxu0 0
        %1234 = vmatprep.subr.bf16.mxu0 0
        %1235 = vmatpush1.bf16.xpose.msra.mxu0 0
        %1236 = vmatprep.subr.bf16.mxu0 0
        %1237 = vmatpush1.bf16.xpose.msra.mxu0 0
        %1238 = vmatprep.subr.bf16.mxu0 0
        %1239 = vmatpush1.bf16.xpose.msra.mxu0 0
        %1240 = vmatprep.subr.bf16.mxu0 0
        %1241 = vmatpush1.bf16.xpose.msra.mxu0 0
        %1242 = vmatprep.subr.bf16.mxu0 0
        %1243 = vmatpush1.bf16.xpose.msra.mxu0 0
        %1244 = vmatprep.subr.bf16.mxu0 0
        %1245 = vmatpush1.bf16.xpose.msra.mxu0 %v1228
        %1246 = vmatprep.subr.bf16.mxu0 0
        %1247 = vmatpush2.bf16.xpose.msra.mxu0 0
        %1248 = vmatprep.subr.bf16.mxu0 0
        %1249 = vmatpush2.bf16.xpose.msra.mxu0 0
        %1250 = vmatprep.subr.bf16.mxu0 0
        %1251 = vmatpush2.bf16.xpose.msra.mxu0 0
        %1252 = vmatprep.subr.bf16.mxu0 0
        %1253 = vmatpush2.bf16.xpose.msra.mxu0 0
        %1254 = vmatprep.subr.bf16.mxu0 0
        %1255 = vmatpush2.bf16.xpose.msra.mxu0 0
        %1256 = vmatprep.subr.bf16.mxu0 0
        %1257 = vmatpush2.bf16.xpose.msra.mxu0 0
        %1258 = vmatprep.subr.bf16.mxu0 0
        %1259 = vmatpush2.bf16.xpose.msra.mxu0 0
        %1260 = vmatprep.subr.bf16.mxu0 0
        %1261 = vmatpush2.bf16.xpose.msra.mxu0 0
        %1262 = vmatprep.mubr.bf16.mxu0 0
        %1263 = vmatmul.mubr.bf16.gmra.mxu0 %v1225
        %v1264 = vpop.f32.mrf.mxu0
        %v1265 = vadd.f32 %v1107, %v1264
        %v1266 = vpop.f32.mrf.mxu0
        %v1267 = vpop.f32.mrf.mxu0
        %v1268 = vpop.f32.mrf.mxu0
        %1269 = vdwg.mxu0
        %v1270 = vsel %vm1111, %v1265, -inf
        %1271 = vmax.xlane.f32.xlu0 %v1270
        %v1272 = vpop.xlane.xlu0 %1271
        %v1273 = vsub.f32 %v1265, %v1272
        %v1274 = vmul.f32 %v1273, 1.442695
        %v1275 = vpow.pop %v1274
        %v1276 = vsel %vm1111, %v1275, 0.0
        %1277 = vadd.xlane.f32.xlu0 %v1276
        %v1278 = vpop.xlane.xlu0 %1277
        %v1279 = vrcp.pop %v1278
        %v1280 = vmul.f32 %v1275, %v1279
        %v1281 = vpack.c.bf16 %v1280, %v1280
        %1283 = vrot.lane.b32.xlu0 %v1110, 120
        %v1284 = vpop.permute.xlu0 %1283
        %v1286 = vsel %vm1111, %v1281, 0
        %v1289 = vsel %vm1173, %v1284, 0
        %1291 = vmatprep.subr.bf16.mxu0 0
        %1292 = vmatpush1.bf16.msra.mxu0 0
        %1293 = vmatprep.subr.bf16.mxu0 0
        %1294 = vmatpush1.bf16.msra.mxu0 0
        %1295 = vmatprep.subr.bf16.mxu0 0
        %1296 = vmatpush1.bf16.msra.mxu0 0
        %1297 = vmatprep.subr.bf16.mxu0 0
        %1298 = vmatpush1.bf16.msra.mxu0 0
        %1299 = vmatprep.subr.bf16.mxu0 0
        %1300 = vmatpush1.bf16.msra.mxu0 0
        %1301 = vmatprep.subr.bf16.mxu0 0
        %1302 = vmatpush1.bf16.msra.mxu0 0
        %1303 = vmatprep.subr.bf16.mxu0 0
        %1304 = vmatpush1.bf16.msra.mxu0 0
        %1305 = vmatprep.subr.bf16.mxu0 0
        %1306 = vmatpush1.bf16.msra.mxu0 %v1289
        %1307 = vmatprep.subr.bf16.mxu0 0
        %1308 = vmatpush2.bf16.msra.mxu0 0
        %1309 = vmatprep.subr.bf16.mxu0 0
        %1310 = vmatpush2.bf16.msra.mxu0 0
        %1311 = vmatprep.subr.bf16.mxu0 0
        %1312 = vmatpush2.bf16.msra.mxu0 0
        %1313 = vmatprep.subr.bf16.mxu0 0
        %1314 = vmatpush2.bf16.msra.mxu0 0
        %1315 = vmatprep.subr.bf16.mxu0 0
        %1316 = vmatpush2.bf16.msra.mxu0 0
        %1317 = vmatprep.subr.bf16.mxu0 0
        %1318 = vmatpush2.bf16.msra.mxu0 0
        %1319 = vmatprep.subr.bf16.mxu0 0
        %1320 = vmatpush2.bf16.msra.mxu0 0
        %1321 = vmatprep.subr.bf16.mxu0 0
        %1322 = vmatpush2.bf16.msra.mxu0 0
        %1323 = vmatprep.mubr.bf16.mxu0 0
        %1324 = vmatmul.mubr.bf16.gmra.mxu0 %v1286
        %v1325 = vpop.f32.mrf.mxu0
        %v1326 = vadd.f32 0.0, %v1325
        %v1327 = vpop.f32.mrf.mxu0
        %v1328 = vpop.f32.mrf.mxu0
        %v1329 = vpop.f32.mrf.mxu0
        %1330 = vdwg.mxu0
        %1332 = vrot.lane.b32.xlu0 %v1326, 8
        %v1333 = vpop.permute.xlu0 %1332
        %vm1335 = vcmask 130112
        %1336 = vst.msk [vmem:[#allocation2] sm:$0xff] %vm1335, %v1333
        %1337 = vrot.lane.b32.xlu0 %v1108, 112
        %v1338 = vpop.permute.xlu0 %1337
        %1339 = vrot.lane.b32.xlu0 %v1109, 112
        %v1340 = vpop.permute.xlu0 %1339
        %v1342 = vsel %vm1111, %v1338, 0
        %v1345 = vsel %vm1111, %v1340, 0
        %1347 = vmatprep.subr.bf16.mxu0 0
        %1348 = vmatpush1.bf16.xpose.msra.mxu0 0
        %1349 = vmatprep.subr.bf16.mxu0 0
        %1350 = vmatpush1.bf16.xpose.msra.mxu0 0
        %1351 = vmatprep.subr.bf16.mxu0 0
        %1352 = vmatpush1.bf16.xpose.msra.mxu0 0
        %1353 = vmatprep.subr.bf16.mxu0 0
        %1354 = vmatpush1.bf16.xpose.msra.mxu0 0
        %1355 = vmatprep.subr.bf16.mxu0 0
        %1356 = vmatpush1.bf16.xpose.msra.mxu0 0
        %1357 = vmatprep.subr.bf16.mxu0 0
        %1358 = vmatpush1.bf16.xpose.msra.mxu0 0
        %1359 = vmatprep.subr.bf16.mxu0 0
        %1360 = vmatpush1.bf16.xpose.msra.mxu0 0
        %1361 = vmatprep.subr.bf16.mxu0 0
        %1362 = vmatpush1.bf16.xpose.msra.mxu0 %v1345
        %1363 = vmatprep.subr.bf16.mxu0 0
        %1364 = vmatpush2.bf16.xpose.msra.mxu0 0
        %1365 = vmatprep.subr.bf16.mxu0 0
        %1366 = vmatpush2.bf16.xpose.msra.mxu0 0
        %1367 = vmatprep.subr.bf16.mxu0 0
        %1368 = vmatpush2.bf16.xpose.msra.mxu0 0
        %1369 = vmatprep.subr.bf16.mxu0 0
        %1370 = vmatpush2.bf16.xpose.msra.mxu0 0
        %1371 = vmatprep.subr.bf16.mxu0 0
        %1372 = vmatpush2.bf16.xpose.msra.mxu0 0
        %1373 = vmatprep.subr.bf16.mxu0 0
        %1374 = vmatpush2.bf16.xpose.msra.mxu0 0
        %1375 = vmatprep.subr.bf16.mxu0 0
        %1376 = vmatpush2.bf16.xpose.msra.mxu0 0
        %1377 = vmatprep.subr.bf16.mxu0 0
        %1378 = vmatpush2.bf16.xpose.msra.mxu0 0
        %1379 = vmatprep.mubr.bf16.mxu0 0
        %1380 = vmatmul.mubr.bf16.gmra.mxu0 %v1342
        %v1381 = vpop.f32.mrf.mxu0
        %v1382 = vadd.f32 %v1107, %v1381
        %v1383 = vpop.f32.mrf.mxu0
        %v1384 = vpop.f32.mrf.mxu0
        %v1385 = vpop.f32.mrf.mxu0
        %1386 = vdwg.mxu0
        %v1387 = vsel %vm1111, %v1382, -inf
        %1388 = vmax.xlane.f32.xlu0 %v1387
        %v1389 = vpop.xlane.xlu0 %1388
        %v1390 = vsub.f32 %v1382, %v1389
        %v1391 = vmul.f32 %v1390, 1.442695
        %v1392 = vpow.pop %v1391
        %v1393 = vsel %vm1111, %v1392, 0.0
        %1394 = vadd.xlane.f32.xlu0 %v1393
        %v1395 = vpop.xlane.xlu0 %1394
        %v1396 = vrcp.pop %v1395
        %v1397 = vmul.f32 %v1392, %v1396
        %v1398 = vpack.c.bf16 %v1397, %v1397
        %1399 = vrot.lane.b32.xlu0 %v1110, 112
        %v1400 = vpop.permute.xlu0 %1399
        %v1402 = vsel %vm1111, %v1398, 0
        %v1405 = vsel %vm1173, %v1400, 0
        %1407 = vmatprep.subr.bf16.mxu0 0
        %1408 = vmatpush1.bf16.msra.mxu0 0
        %1409 = vmatprep.subr.bf16.mxu0 0
        %1410 = vmatpush1.bf16.msra.mxu0 0
        %1411 = vmatprep.subr.bf16.mxu0 0
        %1412 = vmatpush1.bf16.msra.mxu0 0
        %1413 = vmatprep.subr.bf16.mxu0 0
        %1414 = vmatpush1.bf16.msra.mxu0 0
        %1415 = vmatprep.subr.bf16.mxu0 0
        %1416 = vmatpush1.bf16.msra.mxu0 0
        %1417 = vmatprep.subr.bf16.mxu0 0
        %1418 = vmatpush1.bf16.msra.mxu0 0
        %1419 = vmatprep.subr.bf16.mxu0 0
        %1420 = vmatpush1.bf16.msra.mxu0 0
        %1421 = vmatprep.subr.bf16.mxu0 0
        %1422 = vmatpush1.bf16.msra.mxu0 %v1405
        %1423 = vmatprep.subr.bf16.mxu0 0
        %1424 = vmatpush2.bf16.msra.mxu0 0
        %1425 = vmatprep.subr.bf16.mxu0 0
        %1426 = vmatpush2.bf16.msra.mxu0 0
        %1427 = vmatprep.subr.bf16.mxu0 0
        %1428 = vmatpush2.bf16.msra.mxu0 0
        %1429 = vmatprep.subr.bf16.mxu0 0
        %1430 = vmatpush2.bf16.msra.mxu0 0
        %1431 = vmatprep.subr.bf16.mxu0 0
        %1432 = vmatpush2.bf16.msra.mxu0 0
        %1433 = vmatprep.subr.bf16.mxu0 0
        %1434 = vmatpush2.bf16.msra.mxu0 0
        %1435 = vmatprep.subr.bf16.mxu0 0
        %1436 = vmatpush2.bf16.msra.mxu0 0
        %1437 = vmatprep.subr.bf16.mxu0 0
        %1438 = vmatpush2.bf16.msra.mxu0 0
        %1439 = vmatprep.mubr.bf16.mxu0 0
        %1440 = vmatmul.mubr.bf16.gmra.mxu0 %v1402
        %v1441 = vpop.f32.mrf.mxu0
        %v1442 = vadd.f32 0.0, %v1441
        %v1443 = vpop.f32.mrf.mxu0
        %v1444 = vpop.f32.mrf.mxu0
        %v1445 = vpop.f32.mrf.mxu0
        %1446 = vdwg.mxu0
        %1448 = vrot.lane.b32.xlu0 %v1442, 16
        %v1449 = vpop.permute.xlu0 %1448
        %vm1451 = vcmask 195712
        %1452 = vst.msk [vmem:[#allocation2] sm:$0xff] %vm1451, %v1449
        %1453 = vrot.lane.b32.xlu0 %v1108, 104
        %v1454 = vpop.permute.xlu0 %1453
        %1455 = vrot.lane.b32.xlu0 %v1109, 104
        %v1456 = vpop.permute.xlu0 %1455
        %v1458 = vsel %vm1111, %v1454, 0
        %v1461 = vsel %vm1111, %v1456, 0
        %1463 = vmatprep.subr.bf16.mxu0 0
        %1464 = vmatpush1.bf16.xpose.msra.mxu0 0
        %1465 = vmatprep.subr.bf16.mxu0 0
        %1466 = vmatpush1.bf16.xpose.msra.mxu0 0
        %1467 = vmatprep.subr.bf16.mxu0 0
        %1468 = vmatpush1.bf16.xpose.msra.mxu0 0
        %1469 = vmatprep.subr.bf16.mxu0 0
        %1470 = vmatpush1.bf16.xpose.msra.mxu0 0
        %1471 = vmatprep.subr.bf16.mxu0 0
        %1472 = vmatpush1.bf16.xpose.msra.mxu0 0
        %1473 = vmatprep.subr.bf16.mxu0 0
        %1474 = vmatpush1.bf16.xpose.msra.mxu0 0
        %1475 = vmatprep.subr.bf16.mxu0 0
        %1476 = vmatpush1.bf16.xpose.msra.mxu0 0
        %1477 = vmatprep.subr.bf16.mxu0 0
        %1478 = vmatpush1.bf16.xpose.msra.mxu0 %v1461
        %1479 = vmatprep.subr.bf16.mxu0 0
        %1480 = vmatpush2.bf16.xpose.msra.mxu0 0
        %1481 = vmatprep.subr.bf16.mxu0 0
        %1482 = vmatpush2.bf16.xpose.msra.mxu0 0
        %1483 = vmatprep.subr.bf16.mxu0 0
        %1484 = vmatpush2.bf16.xpose.msra.mxu0 0
        %1485 = vmatprep.subr.bf16.mxu0 0
        %1486 = vmatpush2.bf16.xpose.msra.mxu0 0
        %1487 = vmatprep.subr.bf16.mxu0 0
        %1488 = vmatpush2.bf16.xpose.msra.mxu0 0
        %1489 = vmatprep.subr.bf16.mxu0 0
        %1490 = vmatpush2.bf16.xpose.msra.mxu0 0
        %1491 = vmatprep.subr.bf16.mxu0 0
        %1492 = vmatpush2.bf16.xpose.msra.mxu0 0
        %1493 = vmatprep.subr.bf16.mxu0 0
        %1494 = vmatpush2.bf16.xpose.msra.mxu0 0
        %1495 = vmatprep.mubr.bf16.mxu0 0
        %1496 = vmatmul.mubr.bf16.gmra.mxu0 %v1458
        %v1497 = vpop.f32.mrf.mxu0
        %v1498 = vadd.f32 %v1107, %v1497
        %v1499 = vpop.f32.mrf.mxu0
        %v1500 = vpop.f32.mrf.mxu0
        %v1501 = vpop.f32.mrf.mxu0
        %1502 = vdwg.mxu0
        %v1503 = vsel %vm1111, %v1498, -inf
        %1504 = vmax.xlane.f32.xlu0 %v1503
        %v1505 = vpop.xlane.xlu0 %1504
        %v1506 = vsub.f32 %v1498, %v1505
        %v1507 = vmul.f32 %v1506, 1.442695
        %v1508 = vpow.pop %v1507
        %v1509 = vsel %vm1111, %v1508, 0.0
        %1510 = vadd.xlane.f32.xlu0 %v1509
        %v1511 = vpop.xlane.xlu0 %1510
        %v1512 = vrcp.pop %v1511
        %v1513 = vmul.f32 %v1508, %v1512
        %v1514 = vpack.c.bf16 %v1513, %v1513
        %1515 = vrot.lane.b32.xlu0 %v1110, 104
        %v1516 = vpop.permute.xlu0 %1515
        %v1518 = vsel %vm1111, %v1514, 0
        %v1521 = vsel %vm1173, %v1516, 0
        %1523 = vmatprep.subr.bf16.mxu0 0
        %1524 = vmatpush1.bf16.msra.mxu0 0
        %1525 = vmatprep.subr.bf16.mxu0 0
        %1526 = vmatpush1.bf16.msra.mxu0 0
        %1527 = vmatprep.subr.bf16.mxu0 0
        %1528 = vmatpush1.bf16.msra.mxu0 0
        %1529 = vmatprep.subr.bf16.mxu0 0
        %1530 = vmatpush1.bf16.msra.mxu0 0
        %1531 = vmatprep.subr.bf16.mxu0 0
        %1532 = vmatpush1.bf16.msra.mxu0 0
        %1533 = vmatprep.subr.bf16.mxu0 0
        %1534 = vmatpush1.bf16.msra.mxu0 0
        %1535 = vmatprep.subr.bf16.mxu0 0
        %1536 = vmatpush1.bf16.msra.mxu0 0
        %1537 = vmatprep.subr.bf16.mxu0 0
        %1538 = vmatpush1.bf16.msra.mxu0 %v1521
        %1539 = vmatprep.subr.bf16.mxu0 0
        %1540 = vmatpush2.bf16.msra.mxu0 0
        %1541 = vmatprep.subr.bf16.mxu0 0
        %1542 = vmatpush2.bf16.msra.mxu0 0
        %1543 = vmatprep.subr.bf16.mxu0 0
        %1544 = vmatpush2.bf16.msra.mxu0 0
        %1545 = vmatprep.subr.bf16.mxu0 0
        %1546 = vmatpush2.bf16.msra.mxu0 0
        %1547 = vmatprep.subr.bf16.mxu0 0
        %1548 = vmatpush2.bf16.msra.mxu0 0
        %1549 = vmatprep.subr.bf16.mxu0 0
        %1550 = vmatpush2.bf16.msra.mxu0 0
        %1551 = vmatprep.subr.bf16.mxu0 0
        %1552 = vmatpush2.bf16.msra.mxu0 0
        %1553 = vmatprep.subr.bf16.mxu0 0
        %1554 = vmatpush2.bf16.msra.mxu0 0
        %1555 = vmatprep.mubr.bf16.mxu0 0
        %1556 = vmatmul.mubr.bf16.gmra.mxu0 %v1518
        %v1557 = vpop.f32.mrf.mxu0
        %v1558 = vadd.f32 0.0, %v1557
        %v1559 = vpop.f32.mrf.mxu0
        %v1560 = vpop.f32.mrf.mxu0
        %v1561 = vpop.f32.mrf.mxu0
        %1562 = vdwg.mxu0
        %1564 = vrot.lane.b32.xlu0 %v1558, 24
        %v1565 = vpop.permute.xlu0 %1564
        %vm1567 = vcmask 261312
        %1568 = vst.msk [vmem:[#allocation2] sm:$0xff] %vm1567, %v1565
        %v1569 = vld [vmem:[#allocation2] sm:$0xff]
        %v1570 = vpack.c.bf16 %v1569, %v1569
        %v1571 = vld [vmem:[%s12] sm:$0xf]
        %v1572 = vld [vmem:[%s12 + $0x4] sm:$0xf]
        %v1573 = vld [vmem:[%s12 + $0x8] sm:$0xf]
        %v1574 = vld [vmem:[%s12 + $0xc] sm:$0xf]
        %v1576 = vlaneseq
        %v1577 = vshrl.u32 %v1576, 7
        %v1578 = vsub.s32 0, %v1577
        %v1579 = vrot.slane %v858, %v1578
        %v1585 = vunpack.c.l.b16 %v1571
        %v1586 = vunpack.c.l.b16 %v1572
        %v1587 = vunpack.c.l.b16 %v1573
        %v1588 = vunpack.c.l.b16 %v1574
        %v1589 = vpack.c.b16 %v1586, %v1585
        %v1590 = vpack.c.b16 %v1588, %v1587
        %v1594 = vsel %vm861, %v1570, 0
        %1596 = vmatprep.subr.bf16.mxu0 0
        %1597 = vmatpush1.bf16.msra.mxu0 0
        %1598 = vmatprep.subr.bf16.mxu0 0
        %1599 = vmatpush1.bf16.msra.mxu0 0
        %1600 = vmatprep.subr.bf16.mxu0 0
        %1601 = vmatpush1.bf16.msra.mxu0 0
        %1602 = vmatprep.subr.bf16.mxu0 0
        %1603 = vmatpush1.bf16.msra.mxu0 0
        %1604 = vmatprep.subr.bf16.mxu0 0
        %1605 = vmatpush1.bf16.msra.mxu0 0
        %1606 = vmatprep.subr.bf16.mxu0 0
        %1607 = vmatpush1.bf16.msra.mxu0 0
        %1608 = vmatprep.subr.bf16.mxu0 0
        %1609 = vmatpush1.bf16.msra.mxu0 %v1590
        %1610 = vmatprep.subr.bf16.mxu0 0
        %1611 = vmatpush1.bf16.msra.mxu0 %v1589
        %1612 = vmatprep.subr.bf16.mxu0 0
        %1613 = vmatpush2.bf16.msra.mxu0 0
        %1614 = vmatprep.subr.bf16.mxu0 0
        %1615 = vmatpush2.bf16.msra.mxu0 0
        %1616 = vmatprep.subr.bf16.mxu0 0
        %1617 = vmatpush2.bf16.msra.mxu0 0
        %1618 = vmatprep.subr.bf16.mxu0 0
        %1619 = vmatpush2.bf16.msra.mxu0 0
        %1620 = vmatprep.subr.bf16.mxu0 0
        %1621 = vmatpush2.bf16.msra.mxu0 0
        %1622 = vmatprep.subr.bf16.mxu0 0
        %1623 = vmatpush2.bf16.msra.mxu0 0
        %1624 = vmatprep.subr.bf16.mxu0 0
        %1625 = vmatpush2.bf16.msra.mxu0 0
        %1626 = vmatprep.subr.bf16.mxu0 0
        %1627 = vmatpush2.bf16.msra.mxu0 0
        %1628 = vmatprep.mubr.bf16.mxu0 0
        %1629 = vmatmul.mubr.bf16.gmra.mxu0 %v1594
        %v1630 = vpop.f32.mrf.mxu0
        %v1631 = vadd.f32 %v1579, %v1630
        %v1632 = vpop.f32.mrf.mxu0
        %v1633 = vpop.f32.mrf.mxu0
        %v1634 = vpop.f32.mrf.mxu0
        %1635 = vdwg.mxu0
        %v1636 = vadd.f32 %v849, %v1631
        %v1637 = vsel %vm861, %v1636, 0.0
        %1638 = vadd.xlane.f32.xlu0 %v1637
        %v1639 = vpop.xlane.xlu0 %1638
        %v1640 = vmul.f32 %v1639, %v865
        %v1641 = vsub.f32 %v1636, %v1640
        %v1642 = vmul.f32 %v1641, %v1641
        %v1643 = vsel %vm861, %v1642, 0.0
        %1644 = vadd.xlane.f32.xlu0 %v1643
        %v1645 = vpop.xlane.xlu0 %1644
        %v1646 = vmul.f32 %v1645, %v865
        %v1647 = vadd.f32 %v1646, 1e-05
        %v1648 = vrsqrt.pop %v1647
        %v1649 = vmul.f32 %v1641, %v1648
        %v1651 = vlaneseq
        %v1652 = vshrl.u32 %v1651, 7
        %v1653 = vsub.s32 0, %v1652
        %v1654 = vrot.slane %v853, %v1653
        %v1656 = vmul.f32 %v1649, %v1654
        %v1658 = vlaneseq
        %v1659 = vshrl.u32 %v1658, 7
        %v1660 = vsub.s32 0, %v1659
        %v1661 = vrot.slane %v854, %v1660
        %v1663 = vadd.f32 %v1656, %v1661
        %v1664 = vpack.c.bf16 %v1663, %v1663
        %v1665 = vld [vmem:[#allocation20] sm:$0xf]
        %v1666 = vld [vmem:[#allocation20 + $0x4] sm:$0xf]
        %v1667 = vld [vmem:[#allocation20 + $0x8] sm:$0xf]
        %v1668 = vld [vmem:[#allocation20 + $0xc] sm:$0xf]
        %v1670 = vlaneseq
        %v1671 = vshrl.u32 %v1670, 7
        %v1672 = vsub.s32 0, %v1671
        %v1673 = vrot.slane %v859, %v1672
        %v1679 = vunpack.c.l.b16 %v1665
        %v1680 = vunpack.c.l.b16 %v1666
        %v1681 = vunpack.c.l.b16 %v1667
        %v1682 = vunpack.c.l.b16 %v1668
        %v1683 = vpack.c.b16 %v1680, %v1679
        %v1684 = vpack.c.b16 %v1682, %v1681
        %v1688 = vsel %vm861, %v1664, 0
        %1690 = vmatprep.subr.bf16.mxu0 0
        %1691 = vmatpush1.bf16.msra.mxu0 0
        %1692 = vmatprep.subr.bf16.mxu0 0
        %1693 = vmatpush1.bf16.msra.mxu0 0
        %1694 = vmatprep.subr.bf16.mxu0 0
        %1695 = vmatpush1.bf16.msra.mxu0 0
        %1696 = vmatprep.subr.bf16.mxu0 0
        %1697 = vmatpush1.bf16.msra.mxu0 0
        %1698 = vmatprep.subr.bf16.mxu0 0
        %1699 = vmatpush1.bf16.msra.mxu0 0
        %1700 = vmatprep.subr.bf16.mxu0 0
        %1701 = vmatpush1.bf16.msra.mxu0 0
        %1702 = vmatprep.subr.bf16.mxu0 0
        %1703 = vmatpush1.bf16.msra.mxu0 %v1684
        %1704 = vmatprep.subr.bf16.mxu0 0
        %1705 = vmatpush1.bf16.msra.mxu0 %v1683
        %1706 = vmatprep.subr.bf16.mxu0 0
        %1707 = vmatpush2.bf16.msra.mxu0 0
        %1708 = vmatprep.subr.bf16.mxu0 0
        %1709 = vmatpush2.bf16.msra.mxu0 0
        %1710 = vmatprep.subr.bf16.mxu0 0
        %1711 = vmatpush2.bf16.msra.mxu0 0
        %1712 = vmatprep.subr.bf16.mxu0 0
        %1713 = vmatpush2.bf16.msra.mxu0 0
        %1714 = vmatprep.subr.bf16.mxu0 0
        %1715 = vmatpush2.bf16.msra.mxu0 0
        %1716 = vmatprep.subr.bf16.mxu0 0
        %1717 = vmatpush2.bf16.msra.mxu0 0
        %1718 = vmatprep.subr.bf16.mxu0 0
        %1719 = vmatpush2.bf16.msra.mxu0 0
        %1720 = vmatprep.subr.bf16.mxu0 0
        %1721 = vmatpush2.bf16.msra.mxu0 0
        %1722 = vmatprep.mubr.bf16.mxu0 0
        %1723 = vmatmul.mubr.bf16.gmra.mxu0 %v1688
        %v1724 = vpop.f32.mrf.mxu0
        %v1725 = vadd.f32 %v1673, %v1724
        %v1726 = vpop.f32.mrf.mxu0
        %v1727 = vpop.f32.mrf.mxu0
        %v1728 = vpop.f32.mrf.mxu0
        %1729 = vdwg.mxu0
        %v1730 = vmax.f32 %v1725, 0.0
        %v1731 = vpack.c.bf16 %v1730, %v1730
        %v1732 = vld [vmem:[%s18] sm:$0xf]
        %v1733 = vld [vmem:[%s18 + $0x4] sm:$0xf]
        %v1734 = vld [vmem:[%s18 + $0x8] sm:$0xf]
        %v1735 = vld [vmem:[%s18 + $0xc] sm:$0xf]
        %v1736 = vld [vmem:[%s18 + $0x10] sm:$0xf]
        %v1737 = vld [vmem:[%s18 + $0x14] sm:$0xf]
        %v1738 = vld [vmem:[%s18 + $0x18] sm:$0xf]
        %v1739 = vld [vmem:[%s18 + $0x1c] sm:$0xf]
        %v1740 = vld [vmem:[%s18 + $0x20] sm:$0xf]
        %v1741 = vld [vmem:[%s18 + $0x24] sm:$0xf]
        %v1742 = vld [vmem:[%s18 + $0x28] sm:$0xf]
        %v1743 = vld [vmem:[%s18 + $0x2c] sm:$0xf]
        %v1744 = vld [vmem:[%s18 + $0x30] sm:$0xf]
        %v1745 = vld [vmem:[%s18 + $0x34] sm:$0xf]
        %v1746 = vld [vmem:[%s18 + $0x38] sm:$0xf]
        %v1747 = vld [vmem:[%s18 + $0x3c] sm:$0xf]
        %v1749 = vlaneseq
        %v1750 = vshrl.u32 %v1749, 7
        %v1751 = vsub.s32 0, %v1750
        %v1752 = vrot.slane %v860, %v1751
        %v1770 = vunpack.c.l.b16 %v1732
        %v1771 = vunpack.c.l.b16 %v1733
        %v1772 = vunpack.c.l.b16 %v1734
        %v1773 = vunpack.c.l.b16 %v1735
        %v1774 = vunpack.c.l.b16 %v1736
        %v1775 = vunpack.c.l.b16 %v1737
        %v1776 = vunpack.c.l.b16 %v1738
        %v1777 = vunpack.c.l.b16 %v1739
        %v1778 = vunpack.c.l.b16 %v1740
        %v1779 = vunpack.c.l.b16 %v1741
        %v1780 = vunpack.c.l.b16 %v1742
        %v1781 = vunpack.c.l.b16 %v1743
        %v1782 = vunpack.c.l.b16 %v1744
        %v1783 = vunpack.c.l.b16 %v1745
        %v1784 = vunpack.c.l.b16 %v1746
        %v1785 = vunpack.c.l.b16 %v1747
        %v1786 = vpack.c.b16 %v1771, %v1770
        %v1787 = vpack.c.b16 %v1773, %v1772
        %v1788 = vpack.c.b16 %v1775, %v1774
        %v1789 = vpack.c.b16 %v1777, %v1776
        %v1790 = vpack.c.b16 %v1779, %v1778
        %v1791 = vpack.c.b16 %v1781, %v1780
        %v1792 = vpack.c.b16 %v1783, %v1782
        %v1793 = vpack.c.b16 %v1785, %v1784
        %1802 = vmatprep.subr.bf16.mxu0 0
        %1803 = vmatpush1.bf16.msra.mxu0 %v1793
        %1804 = vmatprep.subr.bf16.mxu0 0
        %1805 = vmatpush1.bf16.msra.mxu0 %v1792
        %1806 = vmatprep.subr.bf16.mxu0 0
        %1807 = vmatpush1.bf16.msra.mxu0 %v1791
        %1808 = vmatprep.subr.bf16.mxu0 0
        %1809 = vmatpush1.bf16.msra.mxu0 %v1790
        %1810 = vmatprep.subr.bf16.mxu0 0
        %1811 = vmatpush1.bf16.msra.mxu0 %v1789
        %1812 = vmatprep.subr.bf16.mxu0 0
        %1813 = vmatpush1.bf16.msra.mxu0 %v1788
        %1814 = vmatprep.subr.bf16.mxu0 0
        %1815 = vmatpush1.bf16.msra.mxu0 %v1787
        %1816 = vmatprep.subr.bf16.mxu0 0
        %1817 = vmatpush1.bf16.msra.mxu0 %v1786
        %1818 = vmatprep.subr.bf16.mxu0 0
        %1819 = vmatpush2.bf16.msra.mxu0 0
        %1820 = vmatprep.subr.bf16.mxu0 0
        %1821 = vmatpush2.bf16.msra.mxu0 0
        %1822 = vmatprep.subr.bf16.mxu0 0
        %1823 = vmatpush2.bf16.msra.mxu0 0
        %1824 = vmatprep.subr.bf16.mxu0 0
        %1825 = vmatpush2.bf16.msra.mxu0 0
        %1826 = vmatprep.subr.bf16.mxu0 0
        %1827 = vmatpush2.bf16.msra.mxu0 0
        %1828 = vmatprep.subr.bf16.mxu0 0
        %1829 = vmatpush2.bf16.msra.mxu0 0
        %1830 = vmatprep.subr.bf16.mxu0 0
        %1831 = vmatpush2.bf16.msra.mxu0 0
        %1832 = vmatprep.subr.bf16.mxu0 0
        %1833 = vmatpush2.bf16.msra.mxu0 0
        %1834 = vmatprep.mubr.bf16.mxu0 0
        %1835 = vmatmul.mubr.bf16.gmra.mxu0 %v1731
        %v1836 = vpop.f32.mrf.mxu0
        %v1837 = vadd.f32 %v1752, %v1836
        %v1838 = vpop.f32.mrf.mxu0
        %v1839 = vpop.f32.mrf.mxu0
        %v1840 = vpop.f32.mrf.mxu0
        %1841 = vdwg.mxu0
        %v1842 = vadd.f32 %v1636, %v1837
        %1843 = vst.msk [vmem:[%s836] sm:$0xff] %vm861, %v1842
        %s1844 = sand.u32 %s507, 1
        %s1845 = scalar_lea.sflag [#allocation5], %s1844
        %s1846 = sand.u32 %s507, 1
        %s1847 = smul.addr %s1846, 8
        %s1848 = scalar_lea.vmem [#allocation23], %s1847
        // Predicated region
        $region149: #{tpu_custom_call.1} parent=99 // pred_check
          %p1849 = pneg %p517
        $region150: #{tpu_custom_call.1} parent=99 // pred_check_branch
          %1851 = sbr.rel (%p1849) target = $region152
        $region151: #{tpu_custom_call.1} parent=99 // pred_region
          %s1853 = ssub.s32 128, 128
          %1854 = vsyncadd %s1845, %s1853
          %s1855 = sadd.s32 %s48, %s47
          %s1856 = smul.addr %s1855, 128
          %s1857 = scalar_lea.hbm %s20, %s1856
          %s1859 = sshll.u32 %s1848, 4
          %s1860 = int_to_ptr.vmem [resolvable:$true] %s1859
          %1862 = dma.vmem_to_hbm [thread:$0]  %s1860, 128, %s1857, %s1845
        $region152: #{tpu_custom_call.1} parent=99 // pred_fallthru
          _
      $region100: #{tpu_custom_call.1} parent=5 // pred_fallthru
        _
      %p1863 = scmp.le.s32.totalorder 2, %s38
      // Predicated region
      $region153: #{tpu_custom_call.1} parent=5 // pred_check
        %p1864 = pneg %p1863
      $region154: #{tpu_custom_call.1} parent=5 // pred_check_branch
        %1866 = sbr.rel (%p1864) target = $region156
      $region155: #{tpu_custom_call.1} parent=5 // pred_region
        %s1867 = ssub.s32 %s38, 2
        // Predicated region
        $region157: #{tpu_custom_call.1} parent=155 // pred_check
          %p1868 = pneg %p523
        $region158: #{tpu_custom_call.1} parent=155 // pred_check_branch
          %1870 = sbr.rel (%p1868) target = $region160
        $region159: #{tpu_custom_call.1} parent=155 // pred_region
          %s1871 = sand.u32 %s508, 1
          %s1872 = scalar_lea.sflag [#allocation5], %s1871
          %s1873 = sand.u32 %s508, 1
          %s1874 = smul.addr %s1873, 8
          %s1875 = scalar_lea.vmem [#allocation23], %s1874
          %1876 = dma.done %s1872, 128
        $region160: #{tpu_custom_call.1} parent=155 // pred_fallthru
          _
      $region156: #{tpu_custom_call.1} parent=5 // pred_fallthru
        _
    $region6: #{tpu_custom_call.1} parent=1 // loop_footer
      %s42 = sadd.s32 1, %s38
    $region7: #{tpu_custom_call.1} parent=1 // loop_footer_branch
      %37 = sbr.rel target = $region3
    $region8: #{tpu_custom_call.1} parent=1 // loop_exit
      _
    %1877 = vsyncpa [#allocation4], 1
    %s1878 = scalar_lea.sflag [#allocation4], 1
    %1879 = vsyncpa %s1878, 1
    %1880 = vsyncpa [#allocation7], 1
    %s1881 = scalar_lea.sflag [#allocation7], 1
    %1882 = vsyncpa %s1881, 1
    %1883 = vsyncpa [#allocation10], 1
    %1884 = vsyncpa [#allocation13], 1
    %1885 = vsyncpa [#allocation16], 1
    %1886 = vsyncpa [#allocation19], 1
    %1887 = vsyncpa [#allocation22], 1
    %1888 = vsyncpa [#allocation5], 1
    %s1889 = scalar_lea.sflag [#allocation5], 1
    %1890 = vsyncpa %s1889, 1

</llo_original>
